<compile_context>
chip_gen: v6e
topology: v6e:2x2x1
jax: 0.10.0
libtpu: 0.0.40
codegen_flags: <defaults>
</compile_context>

<pallas_src>
import jax
import jax.numpy as jnp
from jax.experimental import pallas as pl
from jax.experimental.pallas import tpu as pltpu

_SLOPES = (0.1, 0.1, 0.1, 0.2, 0.2)   # leaky_relu negative slopes, layers 1-5
_LANE = 128


def _round_up(x, m):
    return (x + m - 1) // m * m


def mlp_kernel(x_ref,
               w1_ref, b1_ref,
               w2_ref, b2_ref,
               w3_ref, b3_ref,
               w4_ref, b4_ref,
               w5_ref, b5_ref,
               w6_ref, b6_ref,
               out_ref):
    # bf16 activations; each MXU dot accumulates in f32, then the result is
    # cast back to bf16 for the bias add / leaky_relu (bf16 VALU on v6e/v7x).
    h = x_ref[...]                                              # bf16
    w_refs = (w1_ref, w2_ref, w3_ref, w4_ref, w5_ref)
    b_refs = (b1_ref, b2_ref, b3_ref, b4_ref, b5_ref)
    for w_ref, b_ref, slope in zip(w_refs, b_refs, _SLOPES):
        z = jnp.dot(h, w_ref[...], preferred_element_type=jnp.float32)
        z = z.astype(jnp.bfloat16) + b_ref[...]
        h = jnp.where(z > 0, z, slope * z)                      # bf16 leaky_relu
    z = jnp.dot(h, w6_ref[...], preferred_element_type=jnp.float32)
    # Pre-sigmoid logits; sigmoid is applied in the wrapper on the real column
    # only (avoids 127/128 wasted transcendentals on the padded slab).
    out_ref[...] = z.astype(jnp.bfloat16) + b6_ref[...]


def init_params(key, num_features):
    """Deterministic parameter init (PyTorch nn.Linear-style uniform bounds).
    Weights returned already transposed to (in, out), f32."""
    dims = [num_features, 512, 256, 128, 32, 8, 1]
    params = []
    for i in range(6):
        key, kw, kb = jax.random.split(key, 3)
        fan_in, fan_out = dims[i], dims[i + 1]
        bound = 1.0 / jnp.sqrt(fan_in)
        w = jax.random.uniform(kw, (fan_in, fan_out), jnp.float32, -bound, bound)
        b = jax.random.uniform(kb, (1, fan_out), jnp.float32, -bound, bound)
        params.append((w, b))
    return params


def _prepare_kernel_params(params, num_features):
    """Zero-pad narrow tail layers to 128 lanes; cast weights/biases to bf16."""
    dims = [num_features, 512, 256, 128, 32, 8, 1]
    pdims = [num_features, 512, 256, 128, _LANE, _LANE, _LANE]
    kparams = []
    for i, (w, b) in enumerate(params):
        fin, fout = dims[i], dims[i + 1]
        pin, pout = pdims[i], pdims[i + 1]
        wp = jnp.zeros((pin, pout), jnp.float32).at[:fin, :fout].set(w)
        bp = jnp.zeros((1, pout), jnp.float32).at[:, :fout].set(b)
        kparams.append((wp.astype(jnp.bfloat16), bp.astype(jnp.bfloat16)))
    return kparams


def _choose_tile_b(B, tile_b_max):
    # At least 2 grid steps whenever B allows it (v7x megacore), 16-row aligned
    # (bf16 sublane packing), capped so per-step VMEM stays small.
    tile_b = _round_up(max(pl.cdiv(B, 2), 1), 16)
    return min(tile_b_max, max(16, tile_b))


def mlp_forward(x, params, *, tile_b_max=2048):
    B, F = x.shape
    kparams = _prepare_kernel_params(params, F)

    tile_b = _choose_tile_b(B, tile_b_max)
    b_pad = _round_up(B, tile_b)

    x = x.astype(jnp.bfloat16)
    if b_pad != B:
        x = jnp.pad(x, ((0, b_pad - B), (0, 0)))

    n_out = kparams[-1][0].shape[1]            # 128 (lane-dense output slab)
    grid = (b_pad // tile_b,)

    flat_args = [x]
    in_specs = [pl.BlockSpec((tile_b, F), lambda i: (i, 0))]
    for w, b in kparams:
        flat_args += [w, b]
        # Constant index_map -> weights/biases resident across grid steps.
        in_specs += [pl.BlockSpec(w.shape, lambda i: (0, 0)),
                     pl.BlockSpec(b.shape, lambda i: (0, 0))]

    flops = 2 * b_pad * sum(int(w.shape[0]) * int(w.shape[1]) for w, _ in kparams)
    bytes_accessed = (x.size * 2
                      + sum(w.size * 2 + b.size * 2 for w, b in kparams)
                      + b_pad * n_out * 2)
    cost = pl.CostEstimate(flops=flops,
                           transcendentals=0,
                           bytes_accessed=bytes_accessed)

    out = pl.pallas_call(
        mlp_kernel,
        out_shape=jax.ShapeDtypeStruct((b_pad, n_out), jnp.bfloat16),
        grid_spec=pltpu.PrefetchScalarGridSpec(
            num_scalar_prefetch=0,
            grid=grid,
            in_specs=in_specs,
            out_specs=pl.BlockSpec((tile_b, n_out), lambda i: (i, 0)),
        ),
        compiler_params=pltpu.CompilerParams(
            dimension_semantics=("parallel",),
            vmem_limit_bytes=32 * 1024 * 1024,
        ),
        cost_estimate=cost,
    )(*flat_args)

    # Real logits are column 0 of the lane-dense slab; drop batch padding and
    # apply the sigmoid on the (B, 1) result only.
    logits = out[:B, :1].astype(jnp.float32)
    return jax.nn.sigmoid(logits)


def mlp_reference(x, params):
    """Pure-JAX reference using the identical bf16 recipe as the kernel."""
    h = x.astype(jnp.bfloat16)
    for i, (w, b) in enumerate(params[:-1]):
        z = jnp.dot(h, w.astype(jnp.bfloat16),
                    preferred_element_type=jnp.float32)
        z = z.astype(jnp.bfloat16) + b.astype(jnp.bfloat16)
        h = jnp.where(z > 0, z, _SLOPES[i] * z)
    w, b = params[-1]
    z = jnp.dot(h, w.astype(jnp.bfloat16),
                preferred_element_type=jnp.float32)
    z = z.astype(jnp.bfloat16) + b.astype(jnp.bfloat16)
    return jax.nn.sigmoid(z.astype(jnp.float32))


if __name__ == "__main__":
    key = jax.random.PRNGKey(0)
    num_features = 64
    batch = 8

    kx, kp = jax.random.split(key)
    x = jax.random.normal(kx, (batch, num_features), jnp.float32)
    params = init_params(kp, num_features)

    out = mlp_forward(x, params)
    out = jax.block_until_ready(out)

    ref = mlp_reference(x, params)
    assert out.shape == (batch, 1)
    assert jnp.allclose(out, ref, atol=2e-3, rtol=1e-2), "mismatch vs reference"

    print("KERNEL_OK")
</pallas_src>

<mosaic_0001>
module attributes {stable_mosaic.version = 11 : i64} {
  func.func @mlp_kernel(%arg0: i32, %arg1: memref<16x64xbf16, #tpu.memory_space<vmem>>, %arg2: memref<64x512xbf16, #tpu.memory_space<vmem>>, %arg3: memref<1x512xbf16, #tpu.memory_space<vmem>>, %arg4: memref<512x256xbf16, #tpu.memory_space<vmem>>, %arg5: memref<1x256xbf16, #tpu.memory_space<vmem>>, %arg6: memref<256x128xbf16, #tpu.memory_space<vmem>>, %arg7: memref<1x128xbf16, #tpu.memory_space<vmem>>, %arg8: memref<128x128xbf16, #tpu.memory_space<vmem>>, %arg9: memref<1x128xbf16, #tpu.memory_space<vmem>>, %arg10: memref<128x128xbf16, #tpu.memory_space<vmem>>, %arg11: memref<1x128xbf16, #tpu.memory_space<vmem>>, %arg12: memref<128x128xbf16, #tpu.memory_space<vmem>>, %arg13: memref<1x128xbf16, #tpu.memory_space<vmem>>, %arg14: memref<16x128xbf16, #tpu.memory_space<vmem>>) attributes {dimension_semantics = [#tpu.dimension_semantics<parallel>], iteration_bounds = array<i64: 1>, scalar_prefetch = 0 : i64, scratch_operands = 0 : i64, tpu.core_type = #tpu.core_type<tc>, window_params = [{transform_indices = @transform_0, window_bounds = array<i64: 16, 64>}, {pipeline_mode = #tpu.pipeline_mode<synchronous>, transform_indices = @transform_1, window_bounds = array<i64: 64, 512>}, {pipeline_mode = #tpu.pipeline_mode<synchronous>, transform_indices = @transform_2, window_bounds = array<i64: 1, 512>}, {pipeline_mode = #tpu.pipeline_mode<synchronous>, transform_indices = @transform_3, window_bounds = array<i64: 512, 256>}, {pipeline_mode = #tpu.pipeline_mode<synchronous>, transform_indices = @transform_4, window_bounds = array<i64: 1, 256>}, {pipeline_mode = #tpu.pipeline_mode<synchronous>, transform_indices = @transform_5, window_bounds = array<i64: 256, 128>}, {pipeline_mode = #tpu.pipeline_mode<synchronous>, transform_indices = @transform_6, window_bounds = array<i64: 1, 128>}, {pipeline_mode = #tpu.pipeline_mode<synchronous>, transform_indices = @transform_7, window_bounds = array<i64: 128, 128>}, {pipeline_mode = #tpu.pipeline_mode<synchronous>, transform_indices = @transform_8, window_bounds = array<i64: 1, 128>}, {pipeline_mode = #tpu.pipeline_mode<synchronous>, transform_indices = @transform_9, window_bounds = array<i64: 128, 128>}, {pipeline_mode = #tpu.pipeline_mode<synchronous>, transform_indices = @transform_10, window_bounds = array<i64: 1, 128>}, {pipeline_mode = #tpu.pipeline_mode<synchronous>, transform_indices = @transform_11, window_bounds = array<i64: 128, 128>}, {pipeline_mode = #tpu.pipeline_mode<synchronous>, transform_indices = @transform_12, window_bounds = array<i64: 1, 128>}, {transform_indices = @transform_13, window_bounds = array<i64: 16, 128>}]} {
    %c0 = arith.constant 0 : index
    %c0_0 = arith.constant 0 : index
    %0 = vector.load %arg1[%c0, %c0_0] : memref<16x64xbf16, #tpu.memory_space<vmem>>, vector<16x64xbf16>
    %c0_1 = arith.constant 0 : index
    %c0_2 = arith.constant 0 : index
    %1 = vector.load %arg2[%c0_1, %c0_2] : memref<64x512xbf16, #tpu.memory_space<vmem>>, vector<64x512xbf16>
    %cst = arith.constant dense<0.000000e+00> : vector<16x512xf32>
    %2 = tpu.matmul %0, %1, %cst {dimension_numbers = #tpu.dot_dimension_numbers<[1], [0], [0], [1], [0, 0, 1, 1], [], []>} : vector<16x64xbf16>, vector<64x512xbf16>, vector<16x512xf32> -> vector<16x512xf32>
    %3 = arith.truncf %2 : vector<16x512xf32> to vector<16x512xbf16>
    %c0_3 = arith.constant 0 : index
    %c0_4 = arith.constant 0 : index
    %4 = vector.load %arg3[%c0_3, %c0_4] : memref<1x512xbf16, #tpu.memory_space<vmem>>, vector<1x512xbf16>
    %5 = vector.broadcast %4 : vector<1x512xbf16> to vector<16x512xbf16>
    %6 = arith.addf %3, %5 : vector<16x512xbf16>
    %cst_5 = arith.constant 0.000000e+00 : bf16
    %7 = vector.broadcast %cst_5 : bf16 to vector<16x512xbf16>
    %8 = arith.cmpf ogt, %6, %7 : vector<16x512xbf16>
    %cst_6 = arith.constant 1.000980e-01 : bf16
    %9 = vector.broadcast %cst_6 : bf16 to vector<16x512xbf16>
    %10 = arith.mulf %9, %6 : vector<16x512xbf16>
    %11 = arith.select %8, %6, %10 : vector<16x512xi1>, vector<16x512xbf16>
    %c0_7 = arith.constant 0 : index
    %c0_8 = arith.constant 0 : index
    %12 = vector.load %arg4[%c0_7, %c0_8] : memref<512x256xbf16, #tpu.memory_space<vmem>>, vector<512x256xbf16>
    %cst_9 = arith.constant dense<0.000000e+00> : vector<16x256xf32>
    %13 = tpu.matmul %11, %12, %cst_9 {dimension_numbers = #tpu.dot_dimension_numbers<[1], [0], [0], [1], [0, 0, 1, 1], [], []>} : vector<16x512xbf16>, vector<512x256xbf16>, vector<16x256xf32> -> vector<16x256xf32>
    %14 = arith.truncf %13 : vector<16x256xf32> to vector<16x256xbf16>
    %c0_10 = arith.constant 0 : index
    %c0_11 = arith.constant 0 : index
    %15 = vector.load %arg5[%c0_10, %c0_11] : memref<1x256xbf16, #tpu.memory_space<vmem>>, vector<1x256xbf16>
    %16 = vector.broadcast %15 : vector<1x256xbf16> to vector<16x256xbf16>
    %17 = arith.addf %14, %16 : vector<16x256xbf16>
    %cst_12 = arith.constant 0.000000e+00 : bf16
    %18 = vector.broadcast %cst_12 : bf16 to vector<16x256xbf16>
    %19 = arith.cmpf ogt, %17, %18 : vector<16x256xbf16>
    %cst_13 = arith.constant 1.000980e-01 : bf16
    %20 = vector.broadcast %cst_13 : bf16 to vector<16x256xbf16>
    %21 = arith.mulf %20, %17 : vector<16x256xbf16>
    %22 = arith.select %19, %17, %21 : vector<16x256xi1>, vector<16x256xbf16>
    %c0_14 = arith.constant 0 : index
    %c0_15 = arith.constant 0 : index
    %23 = vector.load %arg6[%c0_14, %c0_15] : memref<256x128xbf16, #tpu.memory_space<vmem>>, vector<256x128xbf16>
    %cst_16 = arith.constant dense<0.000000e+00> : vector<16x128xf32>
    %24 = tpu.matmul %22, %23, %cst_16 {dimension_numbers = #tpu.dot_dimension_numbers<[1], [0], [0], [1], [0, 0, 1, 1], [], []>} : vector<16x256xbf16>, vector<256x128xbf16>, vector<16x128xf32> -> vector<16x128xf32>
    %25 = arith.truncf %24 : vector<16x128xf32> to vector<16x128xbf16>
    %c0_17 = arith.constant 0 : index
    %c0_18 = arith.constant 0 : index
    %26 = vector.load %arg7[%c0_17, %c0_18] : memref<1x128xbf16, #tpu.memory_space<vmem>>, vector<1x128xbf16>
    %27 = vector.broadcast %26 : vector<1x128xbf16> to vector<16x128xbf16>
    %28 = arith.addf %25, %27 : vector<16x128xbf16>
    %cst_19 = arith.constant 0.000000e+00 : bf16
    %29 = vector.broadcast %cst_19 : bf16 to vector<16x128xbf16>
    %30 = arith.cmpf ogt, %28, %29 : vector<16x128xbf16>
    %cst_20 = arith.constant 1.000980e-01 : bf16
    %31 = vector.broadcast %cst_20 : bf16 to vector<16x128xbf16>
    %32 = arith.mulf %31, %28 : vector<16x128xbf16>
    %33 = arith.select %30, %28, %32 : vector<16x128xi1>, vector<16x128xbf16>
    %c0_21 = arith.constant 0 : index
    %c0_22 = arith.constant 0 : index
    %34 = vector.load %arg8[%c0_21, %c0_22] : memref<128x128xbf16, #tpu.memory_space<vmem>>, vector<128x128xbf16>
    %cst_23 = arith.constant dense<0.000000e+00> : vector<16x128xf32>
    %35 = tpu.matmul %33, %34, %cst_23 {dimension_numbers = #tpu.dot_dimension_numbers<[1], [0], [0], [1], [0, 0, 1, 1], [], []>} : vector<16x128xbf16>, vector<128x128xbf16>, vector<16x128xf32> -> vector<16x128xf32>
    %36 = arith.truncf %35 : vector<16x128xf32> to vector<16x128xbf16>
    %c0_24 = arith.constant 0 : index
    %c0_25 = arith.constant 0 : index
    %37 = vector.load %arg9[%c0_24, %c0_25] : memref<1x128xbf16, #tpu.memory_space<vmem>>, vector<1x128xbf16>
    %38 = vector.broadcast %37 : vector<1x128xbf16> to vector<16x128xbf16>
    %39 = arith.addf %36, %38 : vector<16x128xbf16>
    %cst_26 = arith.constant 0.000000e+00 : bf16
    %40 = vector.broadcast %cst_26 : bf16 to vector<16x128xbf16>
    %41 = arith.cmpf ogt, %39, %40 : vector<16x128xbf16>
    %cst_27 = arith.constant 2.001950e-01 : bf16
    %42 = vector.broadcast %cst_27 : bf16 to vector<16x128xbf16>
    %43 = arith.mulf %42, %39 : vector<16x128xbf16>
    %44 = arith.select %41, %39, %43 : vector<16x128xi1>, vector<16x128xbf16>
    %c0_28 = arith.constant 0 : index
    %c0_29 = arith.constant 0 : index
    %45 = vector.load %arg10[%c0_28, %c0_29] : memref<128x128xbf16, #tpu.memory_space<vmem>>, vector<128x128xbf16>
    %cst_30 = arith.constant dense<0.000000e+00> : vector<16x128xf32>
    %46 = tpu.matmul %44, %45, %cst_30 {dimension_numbers = #tpu.dot_dimension_numbers<[1], [0], [0], [1], [0, 0, 1, 1], [], []>} : vector<16x128xbf16>, vector<128x128xbf16>, vector<16x128xf32> -> vector<16x128xf32>
    %47 = arith.truncf %46 : vector<16x128xf32> to vector<16x128xbf16>
    %c0_31 = arith.constant 0 : index
    %c0_32 = arith.constant 0 : index
    %48 = vector.load %arg11[%c0_31, %c0_32] : memref<1x128xbf16, #tpu.memory_space<vmem>>, vector<1x128xbf16>
    %49 = vector.broadcast %48 : vector<1x128xbf16> to vector<16x128xbf16>
    %50 = arith.addf %47, %49 : vector<16x128xbf16>
    %cst_33 = arith.constant 0.000000e+00 : bf16
    %51 = vector.broadcast %cst_33 : bf16 to vector<16x128xbf16>
    %52 = arith.cmpf ogt, %50, %51 : vector<16x128xbf16>
    %cst_34 = arith.constant 2.001950e-01 : bf16
    %53 = vector.broadcast %cst_34 : bf16 to vector<16x128xbf16>
    %54 = arith.mulf %53, %50 : vector<16x128xbf16>
    %55 = arith.select %52, %50, %54 : vector<16x128xi1>, vector<16x128xbf16>
    %c0_35 = arith.constant 0 : index
    %c0_36 = arith.constant 0 : index
    %56 = vector.load %arg12[%c0_35, %c0_36] : memref<128x128xbf16, #tpu.memory_space<vmem>>, vector<128x128xbf16>
    %cst_37 = arith.constant dense<0.000000e+00> : vector<16x128xf32>
    %57 = tpu.matmul %55, %56, %cst_37 {dimension_numbers = #tpu.dot_dimension_numbers<[1], [0], [0], [1], [0, 0, 1, 1], [], []>} : vector<16x128xbf16>, vector<128x128xbf16>, vector<16x128xf32> -> vector<16x128xf32>
    %58 = arith.truncf %57 : vector<16x128xf32> to vector<16x128xbf16>
    %c0_38 = arith.constant 0 : index
    %c0_39 = arith.constant 0 : index
    %59 = vector.load %arg13[%c0_38, %c0_39] : memref<1x128xbf16, #tpu.memory_space<vmem>>, vector<1x128xbf16>
    %60 = vector.broadcast %59 : vector<1x128xbf16> to vector<16x128xbf16>
    %61 = arith.addf %58, %60 : vector<16x128xbf16>
    %c0_40 = arith.constant 0 : index
    %c0_41 = arith.constant 0 : index
    %62 = vector.load %arg14[%c0_40, %c0_41] : memref<16x128xbf16, #tpu.memory_space<vmem>>, vector<16x128xbf16>
    tpu.vector_store %arg14[%c0_40, %c0_41], %61 {strides = array<i32>} : memref<16x128xbf16, #tpu.memory_space<vmem>>, vector<16x128xbf16>,
    return
  }
  func.func @transform_0(%arg0: i32) -> (i32, i32) {
    %c0_i32 = arith.constant 0 : i32
    %c0_i32_0 = arith.constant 0 : i32
    return %arg0, %c0_i32 : i32, i32
  }
  func.func @transform_1(%arg0: i32) -> (i32, i32) {
    %c0_i32 = arith.constant 0 : i32
    %c0_i32_0 = arith.constant 0 : i32
    %c0_i32_1 = arith.constant 0 : i32
    return %c0_i32, %c0_i32_0 : i32, i32
  }
  func.func @transform_2(%arg0: i32) -> (i32, i32) {
    %c0_i32 = arith.constant 0 : i32
    %c0_i32_0 = arith.constant 0 : i32
    %c0_i32_1 = arith.constant 0 : i32
    return %c0_i32, %c0_i32_0 : i32, i32
  }
  func.func @transform_3(%arg0: i32) -> (i32, i32) {
    %c0_i32 = arith.constant 0 : i32
    %c0_i32_0 = arith.constant 0 : i32
    %c0_i32_1 = arith.constant 0 : i32
    return %c0_i32, %c0_i32_0 : i32, i32
  }
  func.func @transform_4(%arg0: i32) -> (i32, i32) {
    %c0_i32 = arith.constant 0 : i32
    %c0_i32_0 = arith.constant 0 : i32
    %c0_i32_1 = arith.constant 0 : i32
    return %c0_i32, %c0_i32_0 : i32, i32
  }
  func.func @transform_5(%arg0: i32) -> (i32, i32) {
    %c0_i32 = arith.constant 0 : i32
    %c0_i32_0 = arith.constant 0 : i32
    %c0_i32_1 = arith.constant 0 : i32
    return %c0_i32, %c0_i32_0 : i32, i32
  }
  func.func @transform_6(%arg0: i32) -> (i32, i32) {
    %c0_i32 = arith.constant 0 : i32
    %c0_i32_0 = arith.constant 0 : i32
    %c0_i32_1 = arith.constant 0 : i32
    return %c0_i32, %c0_i32_0 : i32, i32
  }
  func.func @transform_7(%arg0: i32) -> (i32, i32) {
    %c0_i32 = arith.constant 0 : i32
    %c0_i32_0 = arith.constant 0 : i32
    %c0_i32_1 = arith.constant 0 : i32
    return %c0_i32, %c0_i32_0 : i32, i32
  }
  func.func @transform_8(%arg0: i32) -> (i32, i32) {
    %c0_i32 = arith.constant 0 : i32
    %c0_i32_0 = arith.constant 0 : i32
    %c0_i32_1 = arith.constant 0 : i32
    return %c0_i32, %c0_i32_0 : i32, i32
  }
  func.func @transform_9(%arg0: i32) -> (i32, i32) {
    %c0_i32 = arith.constant 0 : i32
    %c0_i32_0 = arith.constant 0 : i32
    %c0_i32_1 = arith.constant 0 : i32
    return %c0_i32, %c0_i32_0 : i32, i32
  }
  func.func @transform_10(%arg0: i32) -> (i32, i32) {
    %c0_i32 = arith.constant 0 : i32
    %c0_i32_0 = arith.constant 0 : i32
    %c0_i32_1 = arith.constant 0 : i32
    return %c0_i32, %c0_i32_0 : i32, i32
  }
  func.func @transform_11(%arg0: i32) -> (i32, i32) {
    %c0_i32 = arith.constant 0 : i32
    %c0_i32_0 = arith.constant 0 : i32
    %c0_i32_1 = arith.constant 0 : i32
    return %c0_i32, %c0_i32_0 : i32, i32
  }
  func.func @transform_12(%arg0: i32) -> (i32, i32) {
    %c0_i32 = arith.constant 0 : i32
    %c0_i32_0 = arith.constant 0 : i32
    %c0_i32_1 = arith.constant 0 : i32
    return %c0_i32, %c0_i32_0 : i32, i32
  }
  func.func @transform_13(%arg0: i32) -> (i32, i32) {
    %c0_i32 = arith.constant 0 : i32
    %c0_i32_0 = arith.constant 0 : i32
    return %arg0, %c0_i32 : i32, i32
  }
}

</mosaic_0001>

<llo_original>
// kernel: tpu_custom_call.1
$region0: #{tpu_custom_call.1}
  #allocation0 [shape = 'u32[]', space=smem, size = 0x4, offset = 0x4, fixed_abs, tag = 'smem constant byte address 0x4 - core index']
  #allocation1 [shape = 'u32[144,128]{1,0:T(1,128)}', space=vmem, size = 0x12000, scoped, tag = 'internal scratch']
  %s0 = inlined_call_operand.hbm [shape: bf16[16,64], index: 0, kind: input, shape index: {}]
  %s1 = inlined_call_operand.hbm [shape: bf16[64,512], index: 1, kind: input, shape index: {}]
  %s2 = inlined_call_operand.hbm [shape: bf16[1,512], index: 2, kind: input, shape index: {}]
  %s3 = inlined_call_operand.hbm [shape: bf16[512,256], index: 3, kind: input, shape index: {}]
  %s4 = inlined_call_operand.vmem [shape: bf16[1,256], index: 4, kind: input, shape index: {}]
  %s5 = inlined_call_operand.hbm [shape: bf16[256,128], index: 5, kind: input, shape index: {}]
  %s6 = inlined_call_operand.vmem [shape: bf16[1,128], index: 6, kind: input, shape index: {}]
  %s7 = inlined_call_operand.hbm [shape: bf16[128,128], index: 7, kind: input, shape index: {}]
  %s8 = inlined_call_operand.vmem [shape: bf16[1,128], index: 8, kind: input, shape index: {}]
  %s9 = inlined_call_operand.hbm [shape: bf16[128,128], index: 9, kind: input, shape index: {}]
  %s10 = inlined_call_operand.vmem [shape: bf16[1,128], index: 10, kind: input, shape index: {}]
  %s11 = inlined_call_operand.hbm [shape: bf16[128,128], index: 11, kind: input, shape index: {}]
  %s12 = inlined_call_operand.vmem [shape: bf16[1,128], index: 12, kind: input, shape index: {}]
  %s13 = inlined_call_operand.hbm [shape: bf16[16,128], index: 13, kind: output, shape index: {}]
  %s14 = sld [smem:[#allocation0]]
  $region94: #{tpu_custom_call.1} parent=0
    _
  %s16 = ssub.s32 1, %s14
  %s17 = scalar_select 0, %s16, %s14
  $region1: #{tpu_custom_call.1} parent=0
    #allocation2 [shape = 'u8[4096]{0}', space=vmem, size = 0x1000, scoped, tag = 'input window, operand 0, single buffered']
    #allocation3 [shape = 's32[1]{0}', space=sflag, size = 0x4, scoped, tag = 'scoped memory for tpu_custom_call.1']
    #allocation4 [shape = 's32[1]{0}', space=sflag, size = 0x4, scoped, tag = 'scoped memory for tpu_custom_call.1']
    #allocation5 [shape = 'u8[65536]{0}', space=vmem, size = 0x10000, scoped, tag = 'input window, operand 1, single buffered']
    #allocation6 [shape = 's32[1]{0}', space=sflag, size = 0x4, scoped, tag = 'scoped memory for tpu_custom_call.1']
    #allocation7 [shape = 'u8[2048]{0}', space=vmem, size = 0x800, scoped, tag = 'input window, operand 2, single buffered']
    #allocation8 [shape = 'u8[262144]{0}', space=vmem, size = 0x40000, scoped, tag = 'input window, operand 3, single buffered']
    #allocation9 [shape = 's32[1]{0}', space=sflag, size = 0x4, scoped, tag = 'scoped memory for tpu_custom_call.1']
    #allocation10 [shape = 'u8[65536]{0}', space=vmem, size = 0x10000, scoped, tag = 'input window, operand 5, single buffered']
    #allocation11 [shape = 'u8[32768]{0}', space=vmem, size = 0x8000, scoped, tag = 'input window, operand 7, single buffered']
    #allocation12 [shape = 's32[1]{0}', space=sflag, size = 0x4, scoped, tag = 'scoped memory for tpu_custom_call.1']
    #allocation13 [shape = 'u8[32768]{0}', space=vmem, size = 0x8000, scoped, tag = 'input window, operand 9, single buffered']
    #allocation14 [shape = 'u8[32768]{0}', space=vmem, size = 0x8000, scoped, tag = 'input window, operand 11, single buffered']
    #allocation15 [shape = 's32[1]{0}', space=sflag, size = 0x4, scoped, tag = 'scoped memory for tpu_custom_call.1']
    #allocation16 [shape = 'u8[4096]{0}', space=vmem, size = 0x1000, scoped, tag = 'output window, operand 0, single buffered']
    %18 = vsyncpa [#allocation3], 0
    %19 = vsyncpa [#allocation6], 0
    %20 = vsyncpa [#allocation9], 0
    %21 = vsyncpa [#allocation12], 0
    %22 = vsyncpa [#allocation15], 0
    %23 = vsyncpa [#allocation4], 0
    // Predicated region
    $region2: #{tpu_custom_call.1} parent=1 // pred_check
      _
    $region3: #{tpu_custom_call.1} parent=1 // pred_check_branch
      %25 = sbr.rel (0) target = $region5
    $region4: #{tpu_custom_call.1} parent=1 // pred_region
      %s27 = ssub.s32 128, 128
      %28 = vsyncadd [#allocation3], %s27
      %s29 = sshll.u32 [#allocation2], 4
      %s30 = int_to_ptr.vmem [resolvable:$true] %s29
      %35 = dma.hbm_to_vmem [thread:$0]  %s0, 128, %s30, [#allocation3], 64, 64, 4
    $region5: #{tpu_custom_call.1} parent=1 // pred_fallthru
      _
    // Predicated region
    $region6: #{tpu_custom_call.1} parent=1 // pred_check
      _
    $region7: #{tpu_custom_call.1} parent=1 // pred_check_branch
      %37 = sbr.rel (0) target = $region9
    $region8: #{tpu_custom_call.1} parent=1 // pred_region
      %s39 = ssub.s32 2048, 2048
      %40 = vsyncadd [#allocation6], %s39
      %s41 = sshll.u32 [#allocation5], 4
      %s42 = int_to_ptr.vmem [resolvable:$true] %s41
      %47 = dma.hbm_to_vmem [thread:$0]  %s1, 2048, %s42, [#allocation6], 256, 256, 16
    $region9: #{tpu_custom_call.1} parent=1 // pred_fallthru
      _
    // Predicated region
    $region10: #{tpu_custom_call.1} parent=1 // pred_check
      _
    $region11: #{tpu_custom_call.1} parent=1 // pred_check_branch
      %49 = sbr.rel (0) target = $region13
    $region12: #{tpu_custom_call.1} parent=1 // pred_region
      %s51 = ssub.s32 64, 64
      %52 = vsyncadd [#allocation6], %s51
      %s54 = sshll.u32 [#allocation7], 4
      %s55 = int_to_ptr.vmem [resolvable:$true] %s54
      %57 = dma.hbm_to_vmem [thread:$0]  %s2, 64, %s55, [#allocation6]
    $region13: #{tpu_custom_call.1} parent=1 // pred_fallthru
      _
    // Predicated region
    $region14: #{tpu_custom_call.1} parent=1 // pred_check
      _
    $region15: #{tpu_custom_call.1} parent=1 // pred_check_branch
      %59 = sbr.rel (0) target = $region17
    $region16: #{tpu_custom_call.1} parent=1 // pred_region
      %s61 = ssub.s32 8192, 8192
      %62 = vsyncadd [#allocation9], %s61
      %s63 = sshll.u32 [#allocation8], 4
      %s64 = int_to_ptr.vmem [resolvable:$true] %s63
      %69 = dma.hbm_to_vmem [thread:$0]  %s3, 8192, %s64, [#allocation9], 128, 128, 8
    $region17: #{tpu_custom_call.1} parent=1 // pred_fallthru
      _
    // Predicated region
    $region18: #{tpu_custom_call.1} parent=1 // pred_check
      _
    $region19: #{tpu_custom_call.1} parent=1 // pred_check_branch
      %71 = sbr.rel (0) target = $region21
    $region20: #{tpu_custom_call.1} parent=1 // pred_region
      _
    $region21: #{tpu_custom_call.1} parent=1 // pred_fallthru
      _
    // Predicated region
    $region22: #{tpu_custom_call.1} parent=1 // pred_check
      _
    $region23: #{tpu_custom_call.1} parent=1 // pred_check_branch
      %73 = sbr.rel (0) target = $region25
    $region24: #{tpu_custom_call.1} parent=1 // pred_region
      %s75 = ssub.s32 2048, 2048
      %76 = vsyncadd [#allocation9], %s75
      %s77 = sshll.u32 [#allocation10], 4
      %s78 = int_to_ptr.vmem [resolvable:$true] %s77
      %83 = dma.hbm_to_vmem [thread:$0]  %s5, 2048, %s78, [#allocation9], 64, 64, 4
    $region25: #{tpu_custom_call.1} parent=1 // pred_fallthru
      _
    // Predicated region
    $region26: #{tpu_custom_call.1} parent=1 // pred_check
      _
    $region27: #{tpu_custom_call.1} parent=1 // pred_check_branch
      %85 = sbr.rel (0) target = $region29
    $region28: #{tpu_custom_call.1} parent=1 // pred_region
      _
    $region29: #{tpu_custom_call.1} parent=1 // pred_fallthru
      _
    // Predicated region
    $region30: #{tpu_custom_call.1} parent=1 // pred_check
      _
    $region31: #{tpu_custom_call.1} parent=1 // pred_check_branch
      %87 = sbr.rel (0) target = $region33
    $region32: #{tpu_custom_call.1} parent=1 // pred_region
      %s89 = ssub.s32 1024, 1024
      %90 = vsyncadd [#allocation12], %s89
      %s91 = sshll.u32 [#allocation11], 4
      %s92 = int_to_ptr.vmem [resolvable:$true] %s91
      %97 = dma.hbm_to_vmem [thread:$0]  %s7, 1024, %s92, [#allocation12], 64, 64, 4
    $region33: #{tpu_custom_call.1} parent=1 // pred_fallthru
      _
    // Predicated region
    $region34: #{tpu_custom_call.1} parent=1 // pred_check
      _
    $region35: #{tpu_custom_call.1} parent=1 // pred_check_branch
      %99 = sbr.rel (0) target = $region37
    $region36: #{tpu_custom_call.1} parent=1 // pred_region
      _
    $region37: #{tpu_custom_call.1} parent=1 // pred_fallthru
      _
    // Predicated region
    $region38: #{tpu_custom_call.1} parent=1 // pred_check
      _
    $region39: #{tpu_custom_call.1} parent=1 // pred_check_branch
      %101 = sbr.rel (0) target = $region41
    $region40: #{tpu_custom_call.1} parent=1 // pred_region
      %s103 = ssub.s32 1024, 1024
      %104 = vsyncadd [#allocation12], %s103
      %s105 = sshll.u32 [#allocation13], 4
      %s106 = int_to_ptr.vmem [resolvable:$true] %s105
      %111 = dma.hbm_to_vmem [thread:$0]  %s9, 1024, %s106, [#allocation12], 64, 64, 4
    $region41: #{tpu_custom_call.1} parent=1 // pred_fallthru
      _
    // Predicated region
    $region42: #{tpu_custom_call.1} parent=1 // pred_check
      _
    $region43: #{tpu_custom_call.1} parent=1 // pred_check_branch
      %113 = sbr.rel (0) target = $region45
    $region44: #{tpu_custom_call.1} parent=1 // pred_region
      _
    $region45: #{tpu_custom_call.1} parent=1 // pred_fallthru
      _
    // Predicated region
    $region46: #{tpu_custom_call.1} parent=1 // pred_check
      _
    $region47: #{tpu_custom_call.1} parent=1 // pred_check_branch
      %115 = sbr.rel (0) target = $region49
    $region48: #{tpu_custom_call.1} parent=1 // pred_region
      %s117 = ssub.s32 1024, 1024
      %118 = vsyncadd [#allocation15], %s117
      %s119 = sshll.u32 [#allocation14], 4
      %s120 = int_to_ptr.vmem [resolvable:$true] %s119
      %125 = dma.hbm_to_vmem [thread:$0]  %s11, 1024, %s120, [#allocation15], 64, 64, 4
    $region49: #{tpu_custom_call.1} parent=1 // pred_fallthru
      _
    // Predicated region
    $region50: #{tpu_custom_call.1} parent=1 // pred_check
      _
    $region51: #{tpu_custom_call.1} parent=1 // pred_check_branch
      %127 = sbr.rel (0) target = $region53
    $region52: #{tpu_custom_call.1} parent=1 // pred_region
      _
    $region53: #{tpu_custom_call.1} parent=1 // pred_fallthru
      _
    // Predicated region
    $region54: #{tpu_custom_call.1} parent=1 // pred_check
      _
    $region55: #{tpu_custom_call.1} parent=1 // pred_check_branch
      %129 = sbr.rel (0) target = $region57
    $region56: #{tpu_custom_call.1} parent=1 // pred_region
      %130 = dma.done [#allocation3], 128
    $region57: #{tpu_custom_call.1} parent=1 // pred_fallthru
      _
    // Predicated region
    $region58: #{tpu_custom_call.1} parent=1 // pred_check
      _
    $region59: #{tpu_custom_call.1} parent=1 // pred_check_branch
      %132 = sbr.rel (0) target = $region61
    $region60: #{tpu_custom_call.1} parent=1 // pred_region
      %133 = dma.done [#allocation6], 2048
    $region61: #{tpu_custom_call.1} parent=1 // pred_fallthru
      _
    // Predicated region
    $region62: #{tpu_custom_call.1} parent=1 // pred_check
      _
    $region63: #{tpu_custom_call.1} parent=1 // pred_check_branch
      %135 = sbr.rel (0) target = $region65
    $region64: #{tpu_custom_call.1} parent=1 // pred_region
      %136 = dma.done [#allocation6], 64
    $region65: #{tpu_custom_call.1} parent=1 // pred_fallthru
      _
    // Predicated region
    $region66: #{tpu_custom_call.1} parent=1 // pred_check
      _
    $region67: #{tpu_custom_call.1} parent=1 // pred_check_branch
      %138 = sbr.rel (0) target = $region69
    $region68: #{tpu_custom_call.1} parent=1 // pred_region
      %139 = dma.done [#allocation9], 8192
    $region69: #{tpu_custom_call.1} parent=1 // pred_fallthru
      _
    // Predicated region
    $region70: #{tpu_custom_call.1} parent=1 // pred_check
      _
    $region71: #{tpu_custom_call.1} parent=1 // pred_check_branch
      %141 = sbr.rel (0) target = $region73
    $region72: #{tpu_custom_call.1} parent=1 // pred_region
      %142 = dma.done [#allocation9], 2048
    $region73: #{tpu_custom_call.1} parent=1 // pred_fallthru
      _
    // Predicated region
    $region74: #{tpu_custom_call.1} parent=1 // pred_check
      _
    $region75: #{tpu_custom_call.1} parent=1 // pred_check_branch
      %144 = sbr.rel (0) target = $region77
    $region76: #{tpu_custom_call.1} parent=1 // pred_region
      %145 = dma.done [#allocation12], 1024
    $region77: #{tpu_custom_call.1} parent=1 // pred_fallthru
      _
    // Predicated region
    $region78: #{tpu_custom_call.1} parent=1 // pred_check
      _
    $region79: #{tpu_custom_call.1} parent=1 // pred_check_branch
      %147 = sbr.rel (0) target = $region81
    $region80: #{tpu_custom_call.1} parent=1 // pred_region
      %148 = dma.done [#allocation12], 1024
    $region81: #{tpu_custom_call.1} parent=1 // pred_fallthru
      _
    // Predicated region
    $region82: #{tpu_custom_call.1} parent=1 // pred_check
      _
    $region83: #{tpu_custom_call.1} parent=1 // pred_check_branch
      %150 = sbr.rel (0) target = $region85
    $region84: #{tpu_custom_call.1} parent=1 // pred_region
      %151 = dma.done [#allocation15], 1024
    $region85: #{tpu_custom_call.1} parent=1 // pred_fallthru
      _
    %v155 = vld [vmem:[#allocation2] sm:$0xf]
    %v156 = vld [vmem:[#allocation2 + $0x4] sm:$0xf]
    %v157 = vld [vmem:[#allocation5] sm:$0xff]
    %v158 = vld [vmem:[#allocation5 + $0x8] sm:$0xff]
    %v159 = vld [vmem:[#allocation5 + $0x10] sm:$0xff]
    %v160 = vld [vmem:[#allocation5 + $0x18] sm:$0xff]
    %v161 = vld [vmem:[#allocation5 + $0x20] sm:$0xff]
    %v162 = vld [vmem:[#allocation5 + $0x28] sm:$0xff]
    %v163 = vld [vmem:[#allocation5 + $0x30] sm:$0xff]
    %v164 = vld [vmem:[#allocation5 + $0x38] sm:$0xff]
    %v165 = vld [vmem:[#allocation5 + $0x40] sm:$0xff]
    %v166 = vld [vmem:[#allocation5 + $0x48] sm:$0xff]
    %v167 = vld [vmem:[#allocation5 + $0x50] sm:$0xff]
    %v168 = vld [vmem:[#allocation5 + $0x58] sm:$0xff]
    %v169 = vld [vmem:[#allocation5 + $0x60] sm:$0xff]
    %v170 = vld [vmem:[#allocation5 + $0x68] sm:$0xff]
    %v171 = vld [vmem:[#allocation5 + $0x70] sm:$0xff]
    %v172 = vld [vmem:[#allocation5 + $0x78] sm:$0xff]
    %v175 = vunpack.c.l.b16 %v155
    %v176 = vunpack.c.l.b16 %v156
    %v177 = vpack.c.b16 %v176, %v175
    %v194 = vunpack.c.l.b16 %v157
    %v195 = vunpack.c.h.b16 %v157
    %v196 = vunpack.c.l.b16 %v158
    %v197 = vunpack.c.h.b16 %v158
    %v198 = vunpack.c.l.b16 %v159
    %v199 = vunpack.c.h.b16 %v159
    %v200 = vunpack.c.l.b16 %v160
    %v201 = vunpack.c.h.b16 %v160
    %v202 = vunpack.c.l.b16 %v161
    %v203 = vunpack.c.h.b16 %v161
    %v204 = vunpack.c.l.b16 %v162
    %v205 = vunpack.c.h.b16 %v162
    %v206 = vunpack.c.l.b16 %v163
    %v207 = vunpack.c.h.b16 %v163
    %v208 = vunpack.c.l.b16 %v164
    %v209 = vunpack.c.h.b16 %v164
    %v210 = vunpack.c.l.b16 %v165
    %v211 = vunpack.c.h.b16 %v165
    %v212 = vunpack.c.l.b16 %v166
    %v213 = vunpack.c.h.b16 %v166
    %v214 = vunpack.c.l.b16 %v167
    %v215 = vunpack.c.h.b16 %v167
    %v216 = vunpack.c.l.b16 %v168
    %v217 = vunpack.c.h.b16 %v168
    %v218 = vunpack.c.l.b16 %v169
    %v219 = vunpack.c.h.b16 %v169
    %v220 = vunpack.c.l.b16 %v170
    %v221 = vunpack.c.h.b16 %v170
    %v222 = vunpack.c.l.b16 %v171
    %v223 = vunpack.c.h.b16 %v171
    %v224 = vunpack.c.l.b16 %v172
    %v225 = vunpack.c.h.b16 %v172
    %v226 = vpack.c.b16 %v198, %v194
    %v227 = vpack.c.b16 %v199, %v195
    %v228 = vpack.c.b16 %v200, %v196
    %v229 = vpack.c.b16 %v201, %v197
    %v230 = vpack.c.b16 %v206, %v202
    %v231 = vpack.c.b16 %v207, %v203
    %v232 = vpack.c.b16 %v208, %v204
    %v233 = vpack.c.b16 %v209, %v205
    %v234 = vpack.c.b16 %v214, %v210
    %v235 = vpack.c.b16 %v215, %v211
    %v236 = vpack.c.b16 %v216, %v212
    %v237 = vpack.c.b16 %v217, %v213
    %v238 = vpack.c.b16 %v222, %v218
    %v239 = vpack.c.b16 %v223, %v219
    %v240 = vpack.c.b16 %v224, %v220
    %v241 = vpack.c.b16 %v225, %v221
    %vm258 = vcmask 523264
    %v260 = vsel %vm258, %v177, 0
    %262 = vmatprep.subr.bf16.mxu0 0
    %263 = vmatpush1.bf16.msra.mxu0 0
    %264 = vmatprep.subr.bf16.mxu0 0
    %265 = vmatpush1.bf16.msra.mxu0 0
    %266 = vmatprep.subr.bf16.mxu0 0
    %267 = vmatpush1.bf16.msra.mxu0 0
    %268 = vmatprep.subr.bf16.mxu0 0
    %269 = vmatpush1.bf16.msra.mxu0 0
    %270 = vmatprep.subr.bf16.mxu0 %v239
    %271 = vmatpush1.bf16.msra.mxu0 %v238
    %272 = vmatprep.subr.bf16.mxu0 %v235
    %273 = vmatpush1.bf16.msra.mxu0 %v234
    %274 = vmatprep.subr.bf16.mxu0 %v231
    %275 = vmatpush1.bf16.msra.mxu0 %v230
    %276 = vmatprep.subr.bf16.mxu0 %v227
    %277 = vmatpush1.bf16.msra.mxu0 %v226
    %278 = vmatprep.subr.bf16.mxu0 0
    %279 = vmatpush2.bf16.msra.mxu0 0
    %280 = vmatprep.subr.bf16.mxu0 0
    %281 = vmatpush2.bf16.msra.mxu0 0
    %282 = vmatprep.subr.bf16.mxu0 0
    %283 = vmatpush2.bf16.msra.mxu0 0
    %284 = vmatprep.subr.bf16.mxu0 0
    %285 = vmatpush2.bf16.msra.mxu0 0
    %286 = vmatprep.subr.bf16.mxu0 0
    %287 = vmatpush2.bf16.msra.mxu0 0
    %288 = vmatprep.subr.bf16.mxu0 0
    %289 = vmatpush2.bf16.msra.mxu0 0
    %290 = vmatprep.subr.bf16.mxu0 0
    %291 = vmatpush2.bf16.msra.mxu0 0
    %292 = vmatprep.subr.bf16.mxu0 0
    %293 = vmatpush2.bf16.msra.mxu0 0
    %294 = vmatprep.mubr.bf16.mxu0 0
    %295 = vmatmul.mubr.bf16.gmra.mxu0 %v260
    %v296 = vpop.f32.mrf.mxu0
    %v297 = vadd.f32 0.0, %v296
    %v298 = vpop.f32.mrf.mxu0
    %v299 = vadd.f32 0.0, %v298
    %v300 = vpop.f32.mrf.mxu0
    %v301 = vadd.f32 0.0, %v300
    %v302 = vpop.f32.mrf.mxu0
    %v303 = vadd.f32 0.0, %v302
    %304 = vdwg.mxu0
    %305 = vmatprep.subr.bf16.mxu0 0
    %306 = vmatpush1.bf16.msra.mxu0 0
    %307 = vmatprep.subr.bf16.mxu0 0
    %308 = vmatpush1.bf16.msra.mxu0 0
    %309 = vmatprep.subr.bf16.mxu0 0
    %310 = vmatpush1.bf16.msra.mxu0 0
    %311 = vmatprep.subr.bf16.mxu0 0
    %312 = vmatpush1.bf16.msra.mxu0 0
    %313 = vmatprep.subr.bf16.mxu0 %v241
    %314 = vmatpush1.bf16.msra.mxu0 %v240
    %315 = vmatprep.subr.bf16.mxu0 %v237
    %316 = vmatpush1.bf16.msra.mxu0 %v236
    %317 = vmatprep.subr.bf16.mxu0 %v233
    %318 = vmatpush1.bf16.msra.mxu0 %v232
    %319 = vmatprep.subr.bf16.mxu0 %v229
    %320 = vmatpush1.bf16.msra.mxu0 %v228
    %321 = vmatprep.subr.bf16.mxu0 0
    %322 = vmatpush2.bf16.msra.mxu0 0
    %323 = vmatprep.subr.bf16.mxu0 0
    %324 = vmatpush2.bf16.msra.mxu0 0
    %325 = vmatprep.subr.bf16.mxu0 0
    %326 = vmatpush2.bf16.msra.mxu0 0
    %327 = vmatprep.subr.bf16.mxu0 0
    %328 = vmatpush2.bf16.msra.mxu0 0
    %329 = vmatprep.subr.bf16.mxu0 0
    %330 = vmatpush2.bf16.msra.mxu0 0
    %331 = vmatprep.subr.bf16.mxu0 0
    %332 = vmatpush2.bf16.msra.mxu0 0
    %333 = vmatprep.subr.bf16.mxu0 0
    %334 = vmatpush2.bf16.msra.mxu0 0
    %335 = vmatprep.subr.bf16.mxu0 0
    %336 = vmatpush2.bf16.msra.mxu0 0
    %337 = vmatprep.mubr.bf16.mxu0 0
    %338 = vmatmul.mubr.bf16.gmra.mxu0 %v260
    %v339 = vpop.f32.mrf.mxu0
    %v340 = vadd.f32 0.0, %v339
    %v341 = vpop.f32.mrf.mxu0
    %v342 = vadd.f32 0.0, %v341
    %v343 = vpop.f32.mrf.mxu0
    %v344 = vadd.f32 0.0, %v343
    %v345 = vpop.f32.mrf.mxu0
    %v346 = vadd.f32 0.0, %v345
    %347 = vdwg.mxu0
    %v348 = vpack.c.bf16 %v301, %v297
    %v349 = vpack.c.bf16 %v303, %v299
    %v350 = vpack.c.bf16 %v344, %v340
    %v351 = vpack.c.bf16 %v346, %v342
    %v352 = vld [vmem:[#allocation7] sm:$0xf]
    %v355 = vunpack.c.l.s4 1966171168
    %v356 = vunpack.c.0.s8 %v355
    %v357 = vlaneseq
    %v358 = vshrl.u32 %v357, 7
    %v359 = vsub.s32 %v356, %v358
    %v360 = vrot.slane %v352, %v359
    %v361 = vcombine.high %v360, %v360
    %v363 = vunpack.c.l.s4 1966171168
    %v364 = vunpack.c.0.s8 %v363
    %v365 = vlaneseq
    %v366 = vshrl.u32 %v365, 7
    %v367 = vsub.s32 %v364, %v366
    %v368 = vrot.slane %v360, %v367
    %v370 = vunpack.c.l.s4 1966171168
    %v371 = vunpack.c.0.s8 %v370
    %v372 = vlaneseq
    %v373 = vshrl.u32 %v372, 7
    %v374 = vsub.s32 %v371, %v373
    %v375 = vrot.slane %v361, %v374
    %v376 = vcombine.high %v368, %v368
    %v377 = vcombine.high %v375, %v375
    %v379 = vpack.i.b16 %v368, %v368
    %v381 = vlaneseq
    %v382 = vshrl.u32 %v381, 7
    %v383 = vsub.s32 0, %v382
    %v384 = vrot.slane %v379, %v383
    %v386 = vpack.i.b16 %v375, %v375
    %v388 = vlaneseq
    %v389 = vshrl.u32 %v388, 7
    %v390 = vsub.s32 0, %v389
    %v391 = vrot.slane %v386, %v390
    %v393 = vpack.i.b16 %v376, %v376
    %v395 = vlaneseq
    %v396 = vshrl.u32 %v395, 7
    %v397 = vsub.s32 0, %v396
    %v398 = vrot.slane %v393, %v397
    %v400 = vpack.i.b16 %v377, %v377
    %v402 = vlaneseq
    %v403 = vshrl.u32 %v402, 7
    %v404 = vsub.s32 0, %v403
    %v405 = vrot.slane %v400, %v404
    %v406 = vadd.bf16 %v348, %v384
    %v407 = vadd.bf16 %v349, %v391
    %v408 = vadd.bf16 %v350, %v398
    %v409 = vadd.bf16 %v351, %v405
    %vm410 = vcmp.gt.bf16.partialorder %v406, 0
    %vm411 = vcmp.gt.bf16.partialorder %v407, 0
    %vm412 = vcmp.gt.bf16.partialorder %v408, 0
    %vm413 = vcmp.gt.bf16.partialorder %v409, 0
    %v414 = vmul.bf16 %v406, 1036860877
    %v415 = vmul.bf16 %v407, 1036860877
    %v416 = vmul.bf16 %v408, 1036860877
    %v417 = vmul.bf16 %v409, 1036860877
    %v418 = vsel %vm410, %v406, %v414
    %v419 = vsel %vm411, %v407, %v415
    %v420 = vsel %vm412, %v408, %v416
    %v421 = vsel %vm413, %v409, %v417
    %v422 = vld [vmem:[#allocation8] sm:$0xff]
    %v423 = vld [vmem:[#allocation8 + $0x8] sm:$0xff]
    %v424 = vld [vmem:[#allocation8 + $0x10] sm:$0xff]
    %v425 = vld [vmem:[#allocation8 + $0x18] sm:$0xff]
    %v426 = vld [vmem:[#allocation8 + $0x20] sm:$0xff]
    %v427 = vld [vmem:[#allocation8 + $0x28] sm:$0xff]
    %v428 = vld [vmem:[#allocation8 + $0x30] sm:$0xff]
    %v429 = vld [vmem:[#allocation8 + $0x38] sm:$0xff]
    %v430 = vld [vmem:[#allocation8 + $0x40] sm:$0xff]
    %v431 = vld [vmem:[#allocation8 + $0x48] sm:$0xff]
    %v432 = vld [vmem:[#allocation8 + $0x50] sm:$0xff]
    %v433 = vld [vmem:[#allocation8 + $0x58] sm:$0xff]
    %v434 = vld [vmem:[#allocation8 + $0x60] sm:$0xff]
    %v435 = vld [vmem:[#allocation8 + $0x68] sm:$0xff]
    %v436 = vld [vmem:[#allocation8 + $0x70] sm:$0xff]
    %v437 = vld [vmem:[#allocation8 + $0x78] sm:$0xff]
    %v438 = vld [vmem:[#allocation8 + $0x80] sm:$0xff]
    %v439 = vld [vmem:[#allocation8 + $0x88] sm:$0xff]
    %v440 = vld [vmem:[#allocation8 + $0x90] sm:$0xff]
    %v441 = vld [vmem:[#allocation8 + $0x98] sm:$0xff]
    %v442 = vld [vmem:[#allocation8 + $0xa0] sm:$0xff]
    %v443 = vld [vmem:[#allocation8 + $0xa8] sm:$0xff]
    %v444 = vld [vmem:[#allocation8 + $0xb0] sm:$0xff]
    %v445 = vld [vmem:[#allocation8 + $0xb8] sm:$0xff]
    %v446 = vld [vmem:[#allocation8 + $0xc0] sm:$0xff]
    %v447 = vld [vmem:[#allocation8 + $0xc8] sm:$0xff]
    %v448 = vld [vmem:[#allocation8 + $0xd0] sm:$0xff]
    %v449 = vld [vmem:[#allocation8 + $0xd8] sm:$0xff]
    %v450 = vld [vmem:[#allocation8 + $0xe0] sm:$0xff]
    %v451 = vld [vmem:[#allocation8 + $0xe8] sm:$0xff]
    %v452 = vld [vmem:[#allocation8 + $0xf0] sm:$0xff]
    %v453 = vld [vmem:[#allocation8 + $0xf8] sm:$0xff]
    %v454 = vld [vmem:[#allocation8 + $0x100] sm:$0xff]
    %v455 = vld [vmem:[#allocation8 + $0x108] sm:$0xff]
    %v456 = vld [vmem:[#allocation8 + $0x110] sm:$0xff]
    %v457 = vld [vmem:[#allocation8 + $0x118] sm:$0xff]
    %v458 = vld [vmem:[#allocation8 + $0x120] sm:$0xff]
    %v459 = vld [vmem:[#allocation8 + $0x128] sm:$0xff]
    %v460 = vld [vmem:[#allocation8 + $0x130] sm:$0xff]
    %v461 = vld [vmem:[#allocation8 + $0x138] sm:$0xff]
    %v462 = vld [vmem:[#allocation8 + $0x140] sm:$0xff]
    %v463 = vld [vmem:[#allocation8 + $0x148] sm:$0xff]
    %v464 = vld [vmem:[#allocation8 + $0x150] sm:$0xff]
    %v465 = vld [vmem:[#allocation8 + $0x158] sm:$0xff]
    %v466 = vld [vmem:[#allocation8 + $0x160] sm:$0xff]
    %v467 = vld [vmem:[#allocation8 + $0x168] sm:$0xff]
    %v468 = vld [vmem:[#allocation8 + $0x170] sm:$0xff]
    %v469 = vld [vmem:[#allocation8 + $0x178] sm:$0xff]
    %v470 = vld [vmem:[#allocation8 + $0x180] sm:$0xff]
    %v471 = vld [vmem:[#allocation8 + $0x188] sm:$0xff]
    %v472 = vld [vmem:[#allocation8 + $0x190] sm:$0xff]
    %v473 = vld [vmem:[#allocation8 + $0x198] sm:$0xff]
    %v474 = vld [vmem:[#allocation8 + $0x1a0] sm:$0xff]
    %v475 = vld [vmem:[#allocation8 + $0x1a8] sm:$0xff]
    %v476 = vld [vmem:[#allocation8 + $0x1b0] sm:$0xff]
    %v477 = vld [vmem:[#allocation8 + $0x1b8] sm:$0xff]
    %v478 = vld [vmem:[#allocation8 + $0x1c0] sm:$0xff]
    %v479 = vld [vmem:[#allocation8 + $0x1c8] sm:$0xff]
    %v480 = vld [vmem:[#allocation8 + $0x1d0] sm:$0xff]
    %v481 = vld [vmem:[#allocation8 + $0x1d8] sm:$0xff]
    %v482 = vld [vmem:[#allocation8 + $0x1e0] sm:$0xff]
    %v483 = vld [vmem:[#allocation8 + $0x1e8] sm:$0xff]
    %v484 = vld [vmem:[#allocation8 + $0x1f0] sm:$0xff]
    %v485 = vld [vmem:[#allocation8 + $0x1f8] sm:$0xff]
    %v550 = vunpack.c.l.b16 %v422
    %v551 = vunpack.c.h.b16 %v422
    %v552 = vunpack.c.l.b16 %v423
    %v553 = vunpack.c.h.b16 %v423
    %v554 = vunpack.c.l.b16 %v424
    %v555 = vunpack.c.h.b16 %v424
    %v556 = vunpack.c.l.b16 %v425
    %v557 = vunpack.c.h.b16 %v425
    %v558 = vunpack.c.l.b16 %v426
    %v559 = vunpack.c.h.b16 %v426
    %v560 = vunpack.c.l.b16 %v427
    %v561 = vunpack.c.h.b16 %v427
    %v562 = vunpack.c.l.b16 %v428
    %v563 = vunpack.c.h.b16 %v428
    %v564 = vunpack.c.l.b16 %v429
    %v565 = vunpack.c.h.b16 %v429
    %v566 = vunpack.c.l.b16 %v430
    %v567 = vunpack.c.h.b16 %v430
    %v568 = vunpack.c.l.b16 %v431
    %v569 = vunpack.c.h.b16 %v431
    %v570 = vunpack.c.l.b16 %v432
    %v571 = vunpack.c.h.b16 %v432
    %v572 = vunpack.c.l.b16 %v433
    %v573 = vunpack.c.h.b16 %v433
    %v574 = vunpack.c.l.b16 %v434
    %v575 = vunpack.c.h.b16 %v434
    %v576 = vunpack.c.l.b16 %v435
    %v577 = vunpack.c.h.b16 %v435
    %v578 = vunpack.c.l.b16 %v436
    %v579 = vunpack.c.h.b16 %v436
    %v580 = vunpack.c.l.b16 %v437
    %v581 = vunpack.c.h.b16 %v437
    %v582 = vunpack.c.l.b16 %v438
    %v583 = vunpack.c.h.b16 %v438
    %v584 = vunpack.c.l.b16 %v439
    %v585 = vunpack.c.h.b16 %v439
    %v586 = vunpack.c.l.b16 %v440
    %v587 = vunpack.c.h.b16 %v440
    %v588 = vunpack.c.l.b16 %v441
    %v589 = vunpack.c.h.b16 %v441
    %v590 = vunpack.c.l.b16 %v442
    %v591 = vunpack.c.h.b16 %v442
    %v592 = vunpack.c.l.b16 %v443
    %v593 = vunpack.c.h.b16 %v443
    %v594 = vunpack.c.l.b16 %v444
    %v595 = vunpack.c.h.b16 %v444
    %v596 = vunpack.c.l.b16 %v445
    %v597 = vunpack.c.h.b16 %v445
    %v598 = vunpack.c.l.b16 %v446
    %v599 = vunpack.c.h.b16 %v446
    %v600 = vunpack.c.l.b16 %v447
    %v601 = vunpack.c.h.b16 %v447
    %v602 = vunpack.c.l.b16 %v448
    %v603 = vunpack.c.h.b16 %v448
    %v604 = vunpack.c.l.b16 %v449
    %v605 = vunpack.c.h.b16 %v449
    %v606 = vunpack.c.l.b16 %v450
    %v607 = vunpack.c.h.b16 %v450
    %v608 = vunpack.c.l.b16 %v451
    %v609 = vunpack.c.h.b16 %v451
    %v610 = vunpack.c.l.b16 %v452
    %v611 = vunpack.c.h.b16 %v452
    %v612 = vunpack.c.l.b16 %v453
    %v613 = vunpack.c.h.b16 %v453
    %v614 = vunpack.c.l.b16 %v454
    %v615 = vunpack.c.h.b16 %v454
    %v616 = vunpack.c.l.b16 %v455
    %v617 = vunpack.c.h.b16 %v455
    %v618 = vunpack.c.l.b16 %v456
    %v619 = vunpack.c.h.b16 %v456
    %v620 = vunpack.c.l.b16 %v457
    %v621 = vunpack.c.h.b16 %v457
    %v622 = vunpack.c.l.b16 %v458
    %v623 = vunpack.c.h.b16 %v458
    %v624 = vunpack.c.l.b16 %v459
    %v625 = vunpack.c.h.b16 %v459
    %v626 = vunpack.c.l.b16 %v460
    %v627 = vunpack.c.h.b16 %v460
    %v628 = vunpack.c.l.b16 %v461
    %v629 = vunpack.c.h.b16 %v461
    %v630 = vunpack.c.l.b16 %v462
    %v631 = vunpack.c.h.b16 %v462
    %v632 = vunpack.c.l.b16 %v463
    %v633 = vunpack.c.h.b16 %v463
    %v634 = vunpack.c.l.b16 %v464
    %v635 = vunpack.c.h.b16 %v464
    %v636 = vunpack.c.l.b16 %v465
    %v637 = vunpack.c.h.b16 %v465
    %v638 = vunpack.c.l.b16 %v466
    %v639 = vunpack.c.h.b16 %v466
    %v640 = vunpack.c.l.b16 %v467
    %v641 = vunpack.c.h.b16 %v467
    %v642 = vunpack.c.l.b16 %v468
    %v643 = vunpack.c.h.b16 %v468
    %v644 = vunpack.c.l.b16 %v469
    %v645 = vunpack.c.h.b16 %v469
    %v646 = vunpack.c.l.b16 %v470
    %v647 = vunpack.c.h.b16 %v470
    %v648 = vunpack.c.l.b16 %v471
    %v649 = vunpack.c.h.b16 %v471
    %v650 = vunpack.c.l.b16 %v472
    %v651 = vunpack.c.h.b16 %v472
    %v652 = vunpack.c.l.b16 %v473
    %v653 = vunpack.c.h.b16 %v473
    %v654 = vunpack.c.l.b16 %v474
    %v655 = vunpack.c.h.b16 %v474
    %v656 = vunpack.c.l.b16 %v475
    %v657 = vunpack.c.h.b16 %v475
    %v658 = vunpack.c.l.b16 %v476
    %v659 = vunpack.c.h.b16 %v476
    %v660 = vunpack.c.l.b16 %v477
    %v661 = vunpack.c.h.b16 %v477
    %v662 = vunpack.c.l.b16 %v478
    %v663 = vunpack.c.h.b16 %v478
    %v664 = vunpack.c.l.b16 %v479
    %v665 = vunpack.c.h.b16 %v479
    %v666 = vunpack.c.l.b16 %v480
    %v667 = vunpack.c.h.b16 %v480
    %v668 = vunpack.c.l.b16 %v481
    %v669 = vunpack.c.h.b16 %v481
    %v670 = vunpack.c.l.b16 %v482
    %v671 = vunpack.c.h.b16 %v482
    %v672 = vunpack.c.l.b16 %v483
    %v673 = vunpack.c.h.b16 %v483
    %v674 = vunpack.c.l.b16 %v484
    %v675 = vunpack.c.h.b16 %v484
    %v676 = vunpack.c.l.b16 %v485
    %v677 = vunpack.c.h.b16 %v485
    %v678 = vpack.c.b16 %v552, %v550
    %v679 = vpack.c.b16 %v553, %v551
    %v680 = vpack.c.b16 %v556, %v554
    %v681 = vpack.c.b16 %v557, %v555
    %v682 = vpack.c.b16 %v560, %v558
    %v683 = vpack.c.b16 %v561, %v559
    %v684 = vpack.c.b16 %v564, %v562
    %v685 = vpack.c.b16 %v565, %v563
    %v686 = vpack.c.b16 %v568, %v566
    %v687 = vpack.c.b16 %v569, %v567
    %v688 = vpack.c.b16 %v572, %v570
    %v689 = vpack.c.b16 %v573, %v571
    %v690 = vpack.c.b16 %v576, %v574
    %v691 = vpack.c.b16 %v577, %v575
    %v692 = vpack.c.b16 %v580, %v578
    %v693 = vpack.c.b16 %v581, %v579
    %v694 = vpack.c.b16 %v584, %v582
    %v695 = vpack.c.b16 %v585, %v583
    %v696 = vpack.c.b16 %v588, %v586
    %v697 = vpack.c.b16 %v589, %v587
    %v698 = vpack.c.b16 %v592, %v590
    %v699 = vpack.c.b16 %v593, %v591
    %v700 = vpack.c.b16 %v596, %v594
    %v701 = vpack.c.b16 %v597, %v595
    %v702 = vpack.c.b16 %v600, %v598
    %v703 = vpack.c.b16 %v601, %v599
    %v704 = vpack.c.b16 %v604, %v602
    %v705 = vpack.c.b16 %v605, %v603
    %v706 = vpack.c.b16 %v608, %v606
    %v707 = vpack.c.b16 %v609, %v607
    %v708 = vpack.c.b16 %v612, %v610
    %v709 = vpack.c.b16 %v613, %v611
    %v710 = vpack.c.b16 %v616, %v614
    %v711 = vpack.c.b16 %v617, %v615
    %v712 = vpack.c.b16 %v620, %v618
    %v713 = vpack.c.b16 %v621, %v619
    %v714 = vpack.c.b16 %v624, %v622
    %v715 = vpack.c.b16 %v625, %v623
    %v716 = vpack.c.b16 %v628, %v626
    %v717 = vpack.c.b16 %v629, %v627
    %v718 = vpack.c.b16 %v632, %v630
    %v719 = vpack.c.b16 %v633, %v631
    %v720 = vpack.c.b16 %v636, %v634
    %v721 = vpack.c.b16 %v637, %v635
    %v722 = vpack.c.b16 %v640, %v638
    %v723 = vpack.c.b16 %v641, %v639
    %v724 = vpack.c.b16 %v644, %v642
    %v725 = vpack.c.b16 %v645, %v643
    %v726 = vpack.c.b16 %v648, %v646
    %v727 = vpack.c.b16 %v649, %v647
    %v728 = vpack.c.b16 %v652, %v650
    %v729 = vpack.c.b16 %v653, %v651
    %v730 = vpack.c.b16 %v656, %v654
    %v731 = vpack.c.b16 %v657, %v655
    %v732 = vpack.c.b16 %v660, %v658
    %v733 = vpack.c.b16 %v661, %v659
    %v734 = vpack.c.b16 %v664, %v662
    %v735 = vpack.c.b16 %v665, %v663
    %v736 = vpack.c.b16 %v668, %v666
    %v737 = vpack.c.b16 %v669, %v667
    %v738 = vpack.c.b16 %v672, %v670
    %v739 = vpack.c.b16 %v673, %v671
    %v740 = vpack.c.b16 %v676, %v674
    %v741 = vpack.c.b16 %v677, %v675
    %806 = vmatprep.subr.bf16.mxu0 %v693
    %807 = vmatpush1.bf16.msra.mxu0 %v692
    %808 = vmatprep.subr.bf16.mxu0 %v691
    %809 = vmatpush1.bf16.msra.mxu0 %v690
    %810 = vmatprep.subr.bf16.mxu0 %v689
    %811 = vmatpush1.bf16.msra.mxu0 %v688
    %812 = vmatprep.subr.bf16.mxu0 %v687
    %813 = vmatpush1.bf16.msra.mxu0 %v686
    %814 = vmatprep.subr.bf16.mxu0 %v685
    %815 = vmatpush1.bf16.msra.mxu0 %v684
    %816 = vmatprep.subr.bf16.mxu0 %v683
    %817 = vmatpush1.bf16.msra.mxu0 %v682
    %818 = vmatprep.subr.bf16.mxu0 %v681
    %819 = vmatpush1.bf16.msra.mxu0 %v680
    %820 = vmatprep.subr.bf16.mxu0 %v679
    %821 = vmatpush1.bf16.msra.mxu0 %v678
    %822 = vmatprep.subr.bf16.mxu0 %v709
    %823 = vmatpush2.bf16.msra.mxu0 %v708
    %824 = vmatprep.subr.bf16.mxu0 %v707
    %825 = vmatpush2.bf16.msra.mxu0 %v706
    %826 = vmatprep.subr.bf16.mxu0 %v705
    %827 = vmatpush2.bf16.msra.mxu0 %v704
    %828 = vmatprep.subr.bf16.mxu0 %v703
    %829 = vmatpush2.bf16.msra.mxu0 %v702
    %830 = vmatprep.subr.bf16.mxu0 %v701
    %831 = vmatpush2.bf16.msra.mxu0 %v700
    %832 = vmatprep.subr.bf16.mxu0 %v699
    %833 = vmatpush2.bf16.msra.mxu0 %v698
    %834 = vmatprep.subr.bf16.mxu0 %v697
    %835 = vmatpush2.bf16.msra.mxu0 %v696
    %836 = vmatprep.subr.bf16.mxu0 %v695
    %837 = vmatpush2.bf16.msra.mxu0 %v694
    %838 = vmatprep.mubr.bf16.mxu0 %v419
    %839 = vmatmul.mubr.bf16.gmra.mxu0 %v418
    %v840 = vpop.f32.mrf.mxu0
    %v841 = vadd.f32 0.0, %v840
    %v842 = vpop.f32.mrf.mxu0
    %v843 = vadd.f32 0.0, %v842
    %v844 = vpop.f32.mrf.mxu0
    %v845 = vadd.f32 0.0, %v844
    %v846 = vpop.f32.mrf.mxu0
    %v847 = vadd.f32 0.0, %v846
    %848 = vdwg.mxu0
    %849 = vmatprep.subr.bf16.mxu0 %v725
    %850 = vmatpush1.bf16.msra.mxu0 %v724
    %851 = vmatprep.subr.bf16.mxu0 %v723
    %852 = vmatpush1.bf16.msra.mxu0 %v722
    %853 = vmatprep.subr.bf16.mxu0 %v721
    %854 = vmatpush1.bf16.msra.mxu0 %v720
    %855 = vmatprep.subr.bf16.mxu0 %v719
    %856 = vmatpush1.bf16.msra.mxu0 %v718
    %857 = vmatprep.subr.bf16.mxu0 %v717
    %858 = vmatpush1.bf16.msra.mxu0 %v716
    %859 = vmatprep.subr.bf16.mxu0 %v715
    %860 = vmatpush1.bf16.msra.mxu0 %v714
    %861 = vmatprep.subr.bf16.mxu0 %v713
    %862 = vmatpush1.bf16.msra.mxu0 %v712
    %863 = vmatprep.subr.bf16.mxu0 %v711
    %864 = vmatpush1.bf16.msra.mxu0 %v710
    %865 = vmatprep.subr.bf16.mxu0 %v741
    %866 = vmatpush2.bf16.msra.mxu0 %v740
    %867 = vmatprep.subr.bf16.mxu0 %v739
    %868 = vmatpush2.bf16.msra.mxu0 %v738
    %869 = vmatprep.subr.bf16.mxu0 %v737
    %870 = vmatpush2.bf16.msra.mxu0 %v736
    %871 = vmatprep.subr.bf16.mxu0 %v735
    %872 = vmatpush2.bf16.msra.mxu0 %v734
    %873 = vmatprep.subr.bf16.mxu0 %v733
    %874 = vmatpush2.bf16.msra.mxu0 %v732
    %875 = vmatprep.subr.bf16.mxu0 %v731
    %876 = vmatpush2.bf16.msra.mxu0 %v730
    %877 = vmatprep.subr.bf16.mxu0 %v729
    %878 = vmatpush2.bf16.msra.mxu0 %v728
    %879 = vmatprep.subr.bf16.mxu0 %v727
    %880 = vmatpush2.bf16.msra.mxu0 %v726
    %881 = vmatprep.mubr.bf16.mxu0 %v421
    %882 = vmatmul.mubr.bf16.gmra.mxu0 %v420
    %v883 = vpop.f32.mrf.mxu0
    %v884 = vadd.f32 %v841, %v883
    %v885 = vpop.f32.mrf.mxu0
    %v886 = vadd.f32 %v843, %v885
    %v887 = vpop.f32.mrf.mxu0
    %v888 = vadd.f32 %v845, %v887
    %v889 = vpop.f32.mrf.mxu0
    %v890 = vadd.f32 %v847, %v889
    %891 = vdwg.mxu0
    %v892 = vpack.c.bf16 %v888, %v884
    %v893 = vpack.c.bf16 %v890, %v886
    %v894 = vld [vmem:[%s4] sm:$0x3]
    %v897 = vunpack.c.l.s4 1966171168
    %v898 = vunpack.c.0.s8 %v897
    %v899 = vlaneseq
    %v900 = vshrl.u32 %v899, 7
    %v901 = vsub.s32 %v898, %v900
    %v902 = vrot.slane %v894, %v901
    %v903 = vcombine.high %v902, %v902
    %v905 = vunpack.c.l.s4 1966171168
    %v906 = vunpack.c.0.s8 %v905
    %v907 = vlaneseq
    %v908 = vshrl.u32 %v907, 7
    %v909 = vsub.s32 %v906, %v908
    %v910 = vrot.slane %v902, %v909
    %v912 = vunpack.c.l.s4 1966171168
    %v913 = vunpack.c.0.s8 %v912
    %v914 = vlaneseq
    %v915 = vshrl.u32 %v914, 7
    %v916 = vsub.s32 %v913, %v915
    %v917 = vrot.slane %v903, %v916
    %v919 = vpack.i.b16 %v910, %v910
    %v921 = vlaneseq
    %v922 = vshrl.u32 %v921, 7
    %v923 = vsub.s32 0, %v922
    %v924 = vrot.slane %v919, %v923
    %v926 = vpack.i.b16 %v917, %v917
    %v928 = vlaneseq
    %v929 = vshrl.u32 %v928, 7
    %v930 = vsub.s32 0, %v929
    %v931 = vrot.slane %v926, %v930
    %v932 = vadd.bf16 %v892, %v924
    %v933 = vadd.bf16 %v893, %v931
    %vm934 = vcmp.gt.bf16.partialorder %v932, 0
    %vm935 = vcmp.gt.bf16.partialorder %v933, 0
    %v936 = vmul.bf16 %v932, 1036860877
    %v937 = vmul.bf16 %v933, 1036860877
    %v938 = vsel %vm934, %v932, %v936
    %v939 = vsel %vm935, %v933, %v937
    %v940 = vld [vmem:[#allocation10] sm:$0xf]
    %v941 = vld [vmem:[#allocation10 + $0x4] sm:$0xf]
    %v942 = vld [vmem:[#allocation10 + $0x8] sm:$0xf]
    %v943 = vld [vmem:[#allocation10 + $0xc] sm:$0xf]
    %v944 = vld [vmem:[#allocation10 + $0x10] sm:$0xf]
    %v945 = vld [vmem:[#allocation10 + $0x14] sm:$0xf]
    %v946 = vld [vmem:[#allocation10 + $0x18] sm:$0xf]
    %v947 = vld [vmem:[#allocation10 + $0x1c] sm:$0xf]
    %v948 = vld [vmem:[#allocation10 + $0x20] sm:$0xf]
    %v949 = vld [vmem:[#allocation10 + $0x24] sm:$0xf]
    %v950 = vld [vmem:[#allocation10 + $0x28] sm:$0xf]
    %v951 = vld [vmem:[#allocation10 + $0x2c] sm:$0xf]
    %v952 = vld [vmem:[#allocation10 + $0x30] sm:$0xf]
    %v953 = vld [vmem:[#allocation10 + $0x34] sm:$0xf]
    %v954 = vld [vmem:[#allocation10 + $0x38] sm:$0xf]
    %v955 = vld [vmem:[#allocation10 + $0x3c] sm:$0xf]
    %v956 = vld [vmem:[#allocation10 + $0x40] sm:$0xf]
    %v957 = vld [vmem:[#allocation10 + $0x44] sm:$0xf]
    %v958 = vld [vmem:[#allocation10 + $0x48] sm:$0xf]
    %v959 = vld [vmem:[#allocation10 + $0x4c] sm:$0xf]
    %v960 = vld [vmem:[#allocation10 + $0x50] sm:$0xf]
    %v961 = vld [vmem:[#allocation10 + $0x54] sm:$0xf]
    %v962 = vld [vmem:[#allocation10 + $0x58] sm:$0xf]
    %v963 = vld [vmem:[#allocation10 + $0x5c] sm:$0xf]
    %v964 = vld [vmem:[#allocation10 + $0x60] sm:$0xf]
    %v965 = vld [vmem:[#allocation10 + $0x64] sm:$0xf]
    %v966 = vld [vmem:[#allocation10 + $0x68] sm:$0xf]
    %v967 = vld [vmem:[#allocation10 + $0x6c] sm:$0xf]
    %v968 = vld [vmem:[#allocation10 + $0x70] sm:$0xf]
    %v969 = vld [vmem:[#allocation10 + $0x74] sm:$0xf]
    %v970 = vld [vmem:[#allocation10 + $0x78] sm:$0xf]
    %v971 = vld [vmem:[#allocation10 + $0x7c] sm:$0xf]
    %v1004 = vunpack.c.l.b16 %v940
    %v1005 = vunpack.c.l.b16 %v941
    %v1006 = vunpack.c.l.b16 %v942
    %v1007 = vunpack.c.l.b16 %v943
    %v1008 = vunpack.c.l.b16 %v944
    %v1009 = vunpack.c.l.b16 %v945
    %v1010 = vunpack.c.l.b16 %v946
    %v1011 = vunpack.c.l.b16 %v947
    %v1012 = vunpack.c.l.b16 %v948
    %v1013 = vunpack.c.l.b16 %v949
    %v1014 = vunpack.c.l.b16 %v950
    %v1015 = vunpack.c.l.b16 %v951
    %v1016 = vunpack.c.l.b16 %v952
    %v1017 = vunpack.c.l.b16 %v953
    %v1018 = vunpack.c.l.b16 %v954
    %v1019 = vunpack.c.l.b16 %v955
    %v1020 = vunpack.c.l.b16 %v956
    %v1021 = vunpack.c.l.b16 %v957
    %v1022 = vunpack.c.l.b16 %v958
    %v1023 = vunpack.c.l.b16 %v959
    %v1024 = vunpack.c.l.b16 %v960
    %v1025 = vunpack.c.l.b16 %v961
    %v1026 = vunpack.c.l.b16 %v962
    %v1027 = vunpack.c.l.b16 %v963
    %v1028 = vunpack.c.l.b16 %v964
    %v1029 = vunpack.c.l.b16 %v965
    %v1030 = vunpack.c.l.b16 %v966
    %v1031 = vunpack.c.l.b16 %v967
    %v1032 = vunpack.c.l.b16 %v968
    %v1033 = vunpack.c.l.b16 %v969
    %v1034 = vunpack.c.l.b16 %v970
    %v1035 = vunpack.c.l.b16 %v971
    %v1036 = vpack.c.b16 %v1005, %v1004
    %v1037 = vpack.c.b16 %v1007, %v1006
    %v1038 = vpack.c.b16 %v1009, %v1008
    %v1039 = vpack.c.b16 %v1011, %v1010
    %v1040 = vpack.c.b16 %v1013, %v1012
    %v1041 = vpack.c.b16 %v1015, %v1014
    %v1042 = vpack.c.b16 %v1017, %v1016
    %v1043 = vpack.c.b16 %v1019, %v1018
    %v1044 = vpack.c.b16 %v1021, %v1020
    %v1045 = vpack.c.b16 %v1023, %v1022
    %v1046 = vpack.c.b16 %v1025, %v1024
    %v1047 = vpack.c.b16 %v1027, %v1026
    %v1048 = vpack.c.b16 %v1029, %v1028
    %v1049 = vpack.c.b16 %v1031, %v1030
    %v1050 = vpack.c.b16 %v1033, %v1032
    %v1051 = vpack.c.b16 %v1035, %v1034
    %1068 = vmatprep.subr.bf16.mxu0 0
    %1069 = vmatpush1.bf16.msra.mxu0 %v1043
    %1070 = vmatprep.subr.bf16.mxu0 0
    %1071 = vmatpush1.bf16.msra.mxu0 %v1042
    %1072 = vmatprep.subr.bf16.mxu0 0
    %1073 = vmatpush1.bf16.msra.mxu0 %v1041
    %1074 = vmatprep.subr.bf16.mxu0 0
    %1075 = vmatpush1.bf16.msra.mxu0 %v1040
    %1076 = vmatprep.subr.bf16.mxu0 0
    %1077 = vmatpush1.bf16.msra.mxu0 %v1039
    %1078 = vmatprep.subr.bf16.mxu0 0
    %1079 = vmatpush1.bf16.msra.mxu0 %v1038
    %1080 = vmatprep.subr.bf16.mxu0 0
    %1081 = vmatpush1.bf16.msra.mxu0 %v1037
    %1082 = vmatprep.subr.bf16.mxu0 0
    %1083 = vmatpush1.bf16.msra.mxu0 %v1036
    %1084 = vmatprep.subr.bf16.mxu0 0
    %1085 = vmatpush2.bf16.msra.mxu0 %v1051
    %1086 = vmatprep.subr.bf16.mxu0 0
    %1087 = vmatpush2.bf16.msra.mxu0 %v1050
    %1088 = vmatprep.subr.bf16.mxu0 0
    %1089 = vmatpush2.bf16.msra.mxu0 %v1049
    %1090 = vmatprep.subr.bf16.mxu0 0
    %1091 = vmatpush2.bf16.msra.mxu0 %v1048
    %1092 = vmatprep.subr.bf16.mxu0 0
    %1093 = vmatpush2.bf16.msra.mxu0 %v1047
    %1094 = vmatprep.subr.bf16.mxu0 0
    %1095 = vmatpush2.bf16.msra.mxu0 %v1046
    %1096 = vmatprep.subr.bf16.mxu0 0
    %1097 = vmatpush2.bf16.msra.mxu0 %v1045
    %1098 = vmatprep.subr.bf16.mxu0 0
    %1099 = vmatpush2.bf16.msra.mxu0 %v1044
    %1100 = vmatprep.mubr.bf16.mxu0 %v939
    %1101 = vmatmul.mubr.bf16.gmra.mxu0 %v938
    %v1102 = vpop.f32.mrf.mxu0
    %v1103 = vadd.f32 0.0, %v1102
    %v1104 = vpop.f32.mrf.mxu0
    %v1105 = vpop.f32.mrf.mxu0
    %v1106 = vadd.f32 0.0, %v1105
    %v1107 = vpop.f32.mrf.mxu0
    %1108 = vdwg.mxu0
    %v1109 = vpack.c.bf16 %v1106, %v1103
    %v1110 = vld [vmem:[%s6] sm:$0x1]
    %v1112 = vpack.i.b16 %v1110, %v1110
    %v1114 = vlaneseq
    %v1115 = vshrl.u32 %v1114, 7
    %v1116 = vsub.s32 0, %v1115
    %v1117 = vrot.slane %v1112, %v1116
    %v1118 = vadd.bf16 %v1109, %v1117
    %vm1119 = vcmp.gt.bf16.partialorder %v1118, 0
    %v1120 = vmul.bf16 %v1118, 1036860877
    %v1121 = vsel %vm1119, %v1118, %v1120
    %v1122 = vld [vmem:[#allocation11] sm:$0xf]
    %v1123 = vld [vmem:[#allocation11 + $0x4] sm:$0xf]
    %v1124 = vld [vmem:[#allocation11 + $0x8] sm:$0xf]
    %v1125 = vld [vmem:[#allocation11 + $0xc] sm:$0xf]
    %v1126 = vld [vmem:[#allocation11 + $0x10] sm:$0xf]
    %v1127 = vld [vmem:[#allocation11 + $0x14] sm:$0xf]
    %v1128 = vld [vmem:[#allocation11 + $0x18] sm:$0xf]
    %v1129 = vld [vmem:[#allocation11 + $0x1c] sm:$0xf]
    %v1130 = vld [vmem:[#allocation11 + $0x20] sm:$0xf]
    %v1131 = vld [vmem:[#allocation11 + $0x24] sm:$0xf]
    %v1132 = vld [vmem:[#allocation11 + $0x28] sm:$0xf]
    %v1133 = vld [vmem:[#allocation11 + $0x2c] sm:$0xf]
    %v1134 = vld [vmem:[#allocation11 + $0x30] sm:$0xf]
    %v1135 = vld [vmem:[#allocation11 + $0x34] sm:$0xf]
    %v1136 = vld [vmem:[#allocation11 + $0x38] sm:$0xf]
    %v1137 = vld [vmem:[#allocation11 + $0x3c] sm:$0xf]
    %v1154 = vunpack.c.l.b16 %v1122
    %v1155 = vunpack.c.l.b16 %v1123
    %v1156 = vunpack.c.l.b16 %v1124
    %v1157 = vunpack.c.l.b16 %v1125
    %v1158 = vunpack.c.l.b16 %v1126
    %v1159 = vunpack.c.l.b16 %v1127
    %v1160 = vunpack.c.l.b16 %v1128
    %v1161 = vunpack.c.l.b16 %v1129
    %v1162 = vunpack.c.l.b16 %v1130
    %v1163 = vunpack.c.l.b16 %v1131
    %v1164 = vunpack.c.l.b16 %v1132
    %v1165 = vunpack.c.l.b16 %v1133
    %v1166 = vunpack.c.l.b16 %v1134
    %v1167 = vunpack.c.l.b16 %v1135
    %v1168 = vunpack.c.l.b16 %v1136
    %v1169 = vunpack.c.l.b16 %v1137
    %v1170 = vpack.c.b16 %v1155, %v1154
    %v1171 = vpack.c.b16 %v1157, %v1156
    %v1172 = vpack.c.b16 %v1159, %v1158
    %v1173 = vpack.c.b16 %v1161, %v1160
    %v1174 = vpack.c.b16 %v1163, %v1162
    %v1175 = vpack.c.b16 %v1165, %v1164
    %v1176 = vpack.c.b16 %v1167, %v1166
    %v1177 = vpack.c.b16 %v1169, %v1168
    %1186 = vmatprep.subr.bf16.mxu0 0
    %1187 = vmatpush1.bf16.msra.mxu0 %v1177
    %1188 = vmatprep.subr.bf16.mxu0 0
    %1189 = vmatpush1.bf16.msra.mxu0 %v1176
    %1190 = vmatprep.subr.bf16.mxu0 0
    %1191 = vmatpush1.bf16.msra.mxu0 %v1175
    %1192 = vmatprep.subr.bf16.mxu0 0
    %1193 = vmatpush1.bf16.msra.mxu0 %v1174
    %1194 = vmatprep.subr.bf16.mxu0 0
    %1195 = vmatpush1.bf16.msra.mxu0 %v1173
    %1196 = vmatprep.subr.bf16.mxu0 0
    %1197 = vmatpush1.bf16.msra.mxu0 %v1172
    %1198 = vmatprep.subr.bf16.mxu0 0
    %1199 = vmatpush1.bf16.msra.mxu0 %v1171
    %1200 = vmatprep.subr.bf16.mxu0 0
    %1201 = vmatpush1.bf16.msra.mxu0 %v1170
    %1202 = vmatprep.subr.bf16.mxu0 0
    %1203 = vmatpush2.bf16.msra.mxu0 0
    %1204 = vmatprep.subr.bf16.mxu0 0
    %1205 = vmatpush2.bf16.msra.mxu0 0
    %1206 = vmatprep.subr.bf16.mxu0 0
    %1207 = vmatpush2.bf16.msra.mxu0 0
    %1208 = vmatprep.subr.bf16.mxu0 0
    %1209 = vmatpush2.bf16.msra.mxu0 0
    %1210 = vmatprep.subr.bf16.mxu0 0
    %1211 = vmatpush2.bf16.msra.mxu0 0
    %1212 = vmatprep.subr.bf16.mxu0 0
    %1213 = vmatpush2.bf16.msra.mxu0 0
    %1214 = vmatprep.subr.bf16.mxu0 0
    %1215 = vmatpush2.bf16.msra.mxu0 0
    %1216 = vmatprep.subr.bf16.mxu0 0
    %1217 = vmatpush2.bf16.msra.mxu0 0
    %1218 = vmatprep.mubr.bf16.mxu0 0
    %1219 = vmatmul.mubr.bf16.gmra.mxu0 %v1121
    %v1220 = vpop.f32.mrf.mxu0
    %v1221 = vadd.f32 0.0, %v1220
    %v1222 = vpop.f32.mrf.mxu0
    %v1223 = vpop.f32.mrf.mxu0
    %v1224 = vadd.f32 0.0, %v1223
    %v1225 = vpop.f32.mrf.mxu0
    %1226 = vdwg.mxu0
    %v1227 = vpack.c.bf16 %v1224, %v1221
    %v1228 = vld [vmem:[%s8] sm:$0x1]
    %v1230 = vpack.i.b16 %v1228, %v1228
    %v1232 = vlaneseq
    %v1233 = vshrl.u32 %v1232, 7
    %v1234 = vsub.s32 0, %v1233
    %v1235 = vrot.slane %v1230, %v1234
    %v1236 = vadd.bf16 %v1227, %v1235
    %vm1237 = vcmp.gt.bf16.partialorder %v1236, 0
    %v1238 = vmul.bf16 %v1236, 1045249613
    %v1239 = vsel %vm1237, %v1236, %v1238
    %v1240 = vld [vmem:[#allocation13] sm:$0xf]
    %v1241 = vld [vmem:[#allocation13 + $0x4] sm:$0xf]
    %v1242 = vld [vmem:[#allocation13 + $0x8] sm:$0xf]
    %v1243 = vld [vmem:[#allocation13 + $0xc] sm:$0xf]
    %v1244 = vld [vmem:[#allocation13 + $0x10] sm:$0xf]
    %v1245 = vld [vmem:[#allocation13 + $0x14] sm:$0xf]
    %v1246 = vld [vmem:[#allocation13 + $0x18] sm:$0xf]
    %v1247 = vld [vmem:[#allocation13 + $0x1c] sm:$0xf]
    %v1248 = vld [vmem:[#allocation13 + $0x20] sm:$0xf]
    %v1249 = vld [vmem:[#allocation13 + $0x24] sm:$0xf]
    %v1250 = vld [vmem:[#allocation13 + $0x28] sm:$0xf]
    %v1251 = vld [vmem:[#allocation13 + $0x2c] sm:$0xf]
    %v1252 = vld [vmem:[#allocation13 + $0x30] sm:$0xf]
    %v1253 = vld [vmem:[#allocation13 + $0x34] sm:$0xf]
    %v1254 = vld [vmem:[#allocation13 + $0x38] sm:$0xf]
    %v1255 = vld [vmem:[#allocation13 + $0x3c] sm:$0xf]
    %v1272 = vunpack.c.l.b16 %v1240
    %v1273 = vunpack.c.l.b16 %v1241
    %v1274 = vunpack.c.l.b16 %v1242
    %v1275 = vunpack.c.l.b16 %v1243
    %v1276 = vunpack.c.l.b16 %v1244
    %v1277 = vunpack.c.l.b16 %v1245
    %v1278 = vunpack.c.l.b16 %v1246
    %v1279 = vunpack.c.l.b16 %v1247
    %v1280 = vunpack.c.l.b16 %v1248
    %v1281 = vunpack.c.l.b16 %v1249
    %v1282 = vunpack.c.l.b16 %v1250
    %v1283 = vunpack.c.l.b16 %v1251
    %v1284 = vunpack.c.l.b16 %v1252
    %v1285 = vunpack.c.l.b16 %v1253
    %v1286 = vunpack.c.l.b16 %v1254
    %v1287 = vunpack.c.l.b16 %v1255
    %v1288 = vpack.c.b16 %v1273, %v1272
    %v1289 = vpack.c.b16 %v1275, %v1274
    %v1290 = vpack.c.b16 %v1277, %v1276
    %v1291 = vpack.c.b16 %v1279, %v1278
    %v1292 = vpack.c.b16 %v1281, %v1280
    %v1293 = vpack.c.b16 %v1283, %v1282
    %v1294 = vpack.c.b16 %v1285, %v1284
    %v1295 = vpack.c.b16 %v1287, %v1286
    %1304 = vmatprep.subr.bf16.mxu0 0
    %1305 = vmatpush1.bf16.msra.mxu0 %v1295
    %1306 = vmatprep.subr.bf16.mxu0 0
    %1307 = vmatpush1.bf16.msra.mxu0 %v1294
    %1308 = vmatprep.subr.bf16.mxu0 0
    %1309 = vmatpush1.bf16.msra.mxu0 %v1293
    %1310 = vmatprep.subr.bf16.mxu0 0
    %1311 = vmatpush1.bf16.msra.mxu0 %v1292
    %1312 = vmatprep.subr.bf16.mxu0 0
    %1313 = vmatpush1.bf16.msra.mxu0 %v1291
    %1314 = vmatprep.subr.bf16.mxu0 0
    %1315 = vmatpush1.bf16.msra.mxu0 %v1290
    %1316 = vmatprep.subr.bf16.mxu0 0
    %1317 = vmatpush1.bf16.msra.mxu0 %v1289
    %1318 = vmatprep.subr.bf16.mxu0 0
    %1319 = vmatpush1.bf16.msra.mxu0 %v1288
    %1320 = vmatprep.subr.bf16.mxu0 0
    %1321 = vmatpush2.bf16.msra.mxu0 0
    %1322 = vmatprep.subr.bf16.mxu0 0
    %1323 = vmatpush2.bf16.msra.mxu0 0
    %1324 = vmatprep.subr.bf16.mxu0 0
    %1325 = vmatpush2.bf16.msra.mxu0 0
    %1326 = vmatprep.subr.bf16.mxu0 0
    %1327 = vmatpush2.bf16.msra.mxu0 0
    %1328 = vmatprep.subr.bf16.mxu0 0
    %1329 = vmatpush2.bf16.msra.mxu0 0
    %1330 = vmatprep.subr.bf16.mxu0 0
    %1331 = vmatpush2.bf16.msra.mxu0 0
    %1332 = vmatprep.subr.bf16.mxu0 0
    %1333 = vmatpush2.bf16.msra.mxu0 0
    %1334 = vmatprep.subr.bf16.mxu0 0
    %1335 = vmatpush2.bf16.msra.mxu0 0
    %1336 = vmatprep.mubr.bf16.mxu0 0
    %1337 = vmatmul.mubr.bf16.gmra.mxu0 %v1239
    %v1338 = vpop.f32.mrf.mxu0
    %v1339 = vadd.f32 0.0, %v1338
    %v1340 = vpop.f32.mrf.mxu0
    %v1341 = vpop.f32.mrf.mxu0
    %v1342 = vadd.f32 0.0, %v1341
    %v1343 = vpop.f32.mrf.mxu0
    %1344 = vdwg.mxu0
    %v1345 = vpack.c.bf16 %v1342, %v1339
    %v1346 = vld [vmem:[%s10] sm:$0x1]
    %v1348 = vpack.i.b16 %v1346, %v1346
    %v1350 = vlaneseq
    %v1351 = vshrl.u32 %v1350, 7
    %v1352 = vsub.s32 0, %v1351
    %v1353 = vrot.slane %v1348, %v1352
    %v1354 = vadd.bf16 %v1345, %v1353
    %vm1355 = vcmp.gt.bf16.partialorder %v1354, 0
    %v1356 = vmul.bf16 %v1354, 1045249613
    %v1357 = vsel %vm1355, %v1354, %v1356
    %v1358 = vld [vmem:[#allocation14] sm:$0xf]
    %v1359 = vld [vmem:[#allocation14 + $0x4] sm:$0xf]
    %v1360 = vld [vmem:[#allocation14 + $0x8] sm:$0xf]
    %v1361 = vld [vmem:[#allocation14 + $0xc] sm:$0xf]
    %v1362 = vld [vmem:[#allocation14 + $0x10] sm:$0xf]
    %v1363 = vld [vmem:[#allocation14 + $0x14] sm:$0xf]
    %v1364 = vld [vmem:[#allocation14 + $0x18] sm:$0xf]
    %v1365 = vld [vmem:[#allocation14 + $0x1c] sm:$0xf]
    %v1366 = vld [vmem:[#allocation14 + $0x20] sm:$0xf]
    %v1367 = vld [vmem:[#allocation14 + $0x24] sm:$0xf]
    %v1368 = vld [vmem:[#allocation14 + $0x28] sm:$0xf]
    %v1369 = vld [vmem:[#allocation14 + $0x2c] sm:$0xf]
    %v1370 = vld [vmem:[#allocation14 + $0x30] sm:$0xf]
    %v1371 = vld [vmem:[#allocation14 + $0x34] sm:$0xf]
    %v1372 = vld [vmem:[#allocation14 + $0x38] sm:$0xf]
    %v1373 = vld [vmem:[#allocation14 + $0x3c] sm:$0xf]
    %v1390 = vunpack.c.l.b16 %v1358
    %v1391 = vunpack.c.l.b16 %v1359
    %v1392 = vunpack.c.l.b16 %v1360
    %v1393 = vunpack.c.l.b16 %v1361
    %v1394 = vunpack.c.l.b16 %v1362
    %v1395 = vunpack.c.l.b16 %v1363
    %v1396 = vunpack.c.l.b16 %v1364
    %v1397 = vunpack.c.l.b16 %v1365
    %v1398 = vunpack.c.l.b16 %v1366
    %v1399 = vunpack.c.l.b16 %v1367
    %v1400 = vunpack.c.l.b16 %v1368
    %v1401 = vunpack.c.l.b16 %v1369
    %v1402 = vunpack.c.l.b16 %v1370
    %v1403 = vunpack.c.l.b16 %v1371
    %v1404 = vunpack.c.l.b16 %v1372
    %v1405 = vunpack.c.l.b16 %v1373
    %v1406 = vpack.c.b16 %v1391, %v1390
    %v1407 = vpack.c.b16 %v1393, %v1392
    %v1408 = vpack.c.b16 %v1395, %v1394
    %v1409 = vpack.c.b16 %v1397, %v1396
    %v1410 = vpack.c.b16 %v1399, %v1398
    %v1411 = vpack.c.b16 %v1401, %v1400
    %v1412 = vpack.c.b16 %v1403, %v1402
    %v1413 = vpack.c.b16 %v1405, %v1404
    %1422 = vmatprep.subr.bf16.mxu0 0
    %1423 = vmatpush1.bf16.msra.mxu0 %v1413
    %1424 = vmatprep.subr.bf16.mxu0 0
    %1425 = vmatpush1.bf16.msra.mxu0 %v1412
    %1426 = vmatprep.subr.bf16.mxu0 0
    %1427 = vmatpush1.bf16.msra.mxu0 %v1411
    %1428 = vmatprep.subr.bf16.mxu0 0
    %1429 = vmatpush1.bf16.msra.mxu0 %v1410
    %1430 = vmatprep.subr.bf16.mxu0 0
    %1431 = vmatpush1.bf16.msra.mxu0 %v1409
    %1432 = vmatprep.subr.bf16.mxu0 0
    %1433 = vmatpush1.bf16.msra.mxu0 %v1408
    %1434 = vmatprep.subr.bf16.mxu0 0
    %1435 = vmatpush1.bf16.msra.mxu0 %v1407
    %1436 = vmatprep.subr.bf16.mxu0 0
    %1437 = vmatpush1.bf16.msra.mxu0 %v1406
    %1438 = vmatprep.subr.bf16.mxu0 0
    %1439 = vmatpush2.bf16.msra.mxu0 0
    %1440 = vmatprep.subr.bf16.mxu0 0
    %1441 = vmatpush2.bf16.msra.mxu0 0
    %1442 = vmatprep.subr.bf16.mxu0 0
    %1443 = vmatpush2.bf16.msra.mxu0 0
    %1444 = vmatprep.subr.bf16.mxu0 0
    %1445 = vmatpush2.bf16.msra.mxu0 0
    %1446 = vmatprep.subr.bf16.mxu0 0
    %1447 = vmatpush2.bf16.msra.mxu0 0
    %1448 = vmatprep.subr.bf16.mxu0 0
    %1449 = vmatpush2.bf16.msra.mxu0 0
    %1450 = vmatprep.subr.bf16.mxu0 0
    %1451 = vmatpush2.bf16.msra.mxu0 0
    %1452 = vmatprep.subr.bf16.mxu0 0
    %1453 = vmatpush2.bf16.msra.mxu0 0
    %1454 = vmatprep.mubr.bf16.mxu0 0
    %1455 = vmatmul.mubr.bf16.gmra.mxu0 %v1357
    %v1456 = vpop.f32.mrf.mxu0
    %v1457 = vadd.f32 0.0, %v1456
    %v1458 = vpop.f32.mrf.mxu0
    %v1459 = vpop.f32.mrf.mxu0
    %v1460 = vadd.f32 0.0, %v1459
    %v1461 = vpop.f32.mrf.mxu0
    %1462 = vdwg.mxu0
    %v1463 = vpack.c.bf16 %v1460, %v1457
    %v1464 = vld [vmem:[%s12] sm:$0x1]
    %v1466 = vpack.i.b16 %v1464, %v1464
    %v1468 = vlaneseq
    %v1469 = vshrl.u32 %v1468, 7
    %v1470 = vsub.s32 0, %v1469
    %v1471 = vrot.slane %v1466, %v1470
    %v1472 = vadd.bf16 %v1463, %v1471
    %v1474 = vunpack.c.l.b16 %v1472
    %v1475 = vunpack.c.h.b16 %v1472
    %v1476 = vpack.c.b16 %v1474, %v1474
    %v1477 = vpack.c.b16 %v1475, %v1475
    %1480 = vst [vmem:[#allocation16] sm:$0xf] %v1476
    %1481 = vst [vmem:[#allocation16 + $0x4] sm:$0xf] %v1477
    // Predicated region
    $region86: #{tpu_custom_call.1} parent=1 // pred_check
      _
    $region87: #{tpu_custom_call.1} parent=1 // pred_check_branch
      %1483 = sbr.rel (0) target = $region89
    $region88: #{tpu_custom_call.1} parent=1 // pred_region
      %s1485 = ssub.s32 128, 128
      %1486 = vsyncadd [#allocation4], %s1485
      %s1487 = sshll.u32 [#allocation16], 4
      %s1488 = int_to_ptr.vmem [resolvable:$true] %s1487
      %1493 = dma.vmem_to_hbm [thread:$0]  %s1488, 128, %s13, [#allocation4], 64, 64, 4
    $region89: #{tpu_custom_call.1} parent=1 // pred_fallthru
      _
    // Predicated region
    $region90: #{tpu_custom_call.1} parent=1 // pred_check
      _
    $region91: #{tpu_custom_call.1} parent=1 // pred_check_branch
      %1495 = sbr.rel (0) target = $region93
    $region92: #{tpu_custom_call.1} parent=1 // pred_region
      %1496 = dma.done [#allocation4], 128
    $region93: #{tpu_custom_call.1} parent=1 // pred_fallthru
      _
    %1497 = vsyncpa [#allocation3], 1
    %1498 = vsyncpa [#allocation6], 1
    %1499 = vsyncpa [#allocation9], 1
    %1500 = vsyncpa [#allocation12], 1
    %1501 = vsyncpa [#allocation15], 1
    %1502 = vsyncpa [#allocation4], 1

</llo_original>
